<compile_context>
chip_gen: v5e
topology: v5e:2x2
jax: 0.10.0
libtpu: 0.0.40
codegen_flags: <defaults>
</compile_context>

<pallas_src>
import functools
import math

import jax
import jax.numpy as jnp
from jax.experimental import pallas as pl
from jax.experimental.pallas import tpu as pltpu


# ----------------------------------------------------------------------------
# Pallas kernels
# ----------------------------------------------------------------------------

def _encoder_kernel(
    # per-batch inputs
    x0_ref,      # (1, Sq, H) initial embeddings (patch-embed + cls + pos), f32
    text_ref,    # (1, Sk, H) omics tokens (K/V source), f32
    # stacked per-layer parameters (leading dim = num_layers)
    ln1_g_ref, ln1_b_ref, lnkv_g_ref, lnkv_b_ref,
    wq_ref, bq_ref, wkv_ref, bkv_ref, wo_ref, bo_ref,
    ln2_g_ref, ln2_b_ref, fc1_w_ref, fc1_b_ref, fc2_w_ref, fc2_b_ref,
    # final encoder LayerNorm
    encn_g_ref, encn_b_ref,
    # output: (1, Sq, H) encoded tokens; doubles as the layer-carried residual
    x_ref,
    # VMEM scratch: per-head contexts assembled head-major on lanes
    ctx_scr,
    *, nh, dh, eps,
):
    H = nh * dh
    layer = pl.program_id(1)

    def ln(v, g, b):
        mu = jnp.mean(v, axis=-1, keepdims=True)
        var = jnp.mean((v - mu) * (v - mu), axis=-1, keepdims=True)
        return (v - mu) * jax.lax.rsqrt(var + eps) * g + b

    # ---- layer 0: seed the residual stream carried in the output ref ----
    @pl.when(layer == 0)
    def _():
        x_ref[0] = x0_ref[0]

    x = x_ref[0]                                  # (Sq, H) f32 residual stream
    text = text_ref[0]                            # (Sk, H) f32

    # ---- cross attention: Q from WSI tokens, K/V from omics tokens ----
    q_in = ln(x, ln1_g_ref[0], ln1_b_ref[0]).astype(jnp.bfloat16)
    kv_in = ln(text, lnkv_g_ref[0], lnkv_b_ref[0]).astype(jnp.bfloat16)

    # Full-K projections, bf16 operands -> f32 accumulation on the MXU.
    q = jnp.dot(q_in, wq_ref[0], preferred_element_type=jnp.float32) + bq_ref[0]       # (Sq, H)
    kv = jnp.dot(kv_in, wkv_ref[0], preferred_element_type=jnp.float32) + bkv_ref[0]   # (Sk, 2H)

    # Heads moved off the lane axis into a batch dim; batched score / context.
    qh = jnp.stack([q[:, h * dh:(h + 1) * dh] for h in range(nh)],
                   axis=0).astype(jnp.bfloat16)                    # (nh, Sq, dh)
    kh = jnp.stack([kv[:, h * dh:(h + 1) * dh] for h in range(nh)],
                   axis=0).astype(jnp.bfloat16)                    # (nh, Sk, dh)
    vh = jnp.stack([kv[:, H + h * dh:H + (h + 1) * dh] for h in range(nh)],
                   axis=0).astype(jnp.bfloat16)                    # (nh, Sk, dh)

    scale = 1.0 / math.sqrt(dh)
    s = jnp.einsum('hqd,hkd->hqk', qh, kh,
                   preferred_element_type=jnp.float32) * scale      # (nh, Sq, Sk) f32
    s = s - jnp.max(s, axis=-1, keepdims=True)
    p = jnp.exp(s)
    p = p * pl.reciprocal(jnp.sum(p, axis=-1, keepdims=True), approx=True)
    ctx = jnp.einsum('hqk,hkd->hqd', p.astype(jnp.bfloat16), vh,
                     preferred_element_type=jnp.float32)             # (nh, Sq, dh)

    # Assemble contexts head-major on lanes, then ONE full-K output projection.
    for h in range(nh):
        ctx_scr[:, h * dh:(h + 1) * dh] = ctx[h]
    attn = jnp.dot(ctx_scr[...].astype(jnp.bfloat16), wo_ref[0],
                   preferred_element_type=jnp.float32) + bo_ref[0]
    x = x + attn

    # ---- MLP ----
    h_in = ln(x, ln2_g_ref[0], ln2_b_ref[0]).astype(jnp.bfloat16)
    h1 = jnp.dot(h_in, fc1_w_ref[0], preferred_element_type=jnp.float32) + fc1_b_ref[0]
    h1 = jax.nn.gelu(h1, approximate=True)        # tanh GELU runs on the EUP
    h2 = jnp.dot(h1.astype(jnp.bfloat16), fc2_w_ref[0],
                 preferred_element_type=jnp.float32) + fc2_b_ref[0]
    x = x + h2

    x_ref[0] = x

    # ---- final encoder LayerNorm, written in place at the last layer ----
    @pl.when(layer == pl.num_programs(1) - 1)
    def _():
        x_ref[0] = ln(x, encn_g_ref[...], encn_b_ref[...])


def _head_kernel(x_ref, w1_ref, b1_ref, w2_ref, b2_ref, wh_ref, bh_ref,
                 rng_ref, shf_ref, o_ref, *, H):
    """CATfusion head (batched): concat(cls, mean) -> 64 -> 16 -> sigmoid*rng+shf."""
    x = x_ref[...]                                   # (B, Sq, H)
    cls_tok = x[:, 0, :]                             # (B, H)
    mean_rest = jnp.mean(x[:, 1:, :], axis=1)        # (B, H)
    w1 = w1_ref[...]                                 # (2H, 64)
    # concat([cls, mean]) @ w1  ==  cls @ w1[:H] + mean @ w1[H:]
    h = (jnp.dot(cls_tok, w1[:H, :], preferred_element_type=jnp.float32)
         + jnp.dot(mean_rest, w1[H:, :], preferred_element_type=jnp.float32)
         + b1_ref[...])
    h = jnp.maximum(h, 0.0)                # Dropout(p=0.5) is identity in eval
    h = jnp.maximum(
        jnp.dot(h, w2_ref[...], preferred_element_type=jnp.float32) + b2_ref[...],
        0.0)
    logit = jnp.dot(h, wh_ref[...], preferred_element_type=jnp.float32) + bh_ref[...]
    o_ref[...] = jax.nn.sigmoid(logit) * rng_ref[...] + shf_ref[...]


# ----------------------------------------------------------------------------
# Parameter initialization (deterministic, synthetic, per-layer params stacked)
# ----------------------------------------------------------------------------

def init_params(key, cfg, omics_dims, in_channels):
    H = cfg["hidden_size"]
    ps = cfg["patch_size"]
    mlp_dim = cfg["mlp_dim"]
    L = cfg["num_layers"]
    n_patches = (cfg["img_size"] // ps) ** 2
    keys = iter(jax.random.split(key, 512))

    def dense(shape, scale=0.02):
        return scale * jax.random.normal(next(keys), shape, jnp.float32)

    bf16 = jnp.bfloat16
    params = {}
    # Embeddings: Conv2d(in_channels, H, ps, stride=ps) lowered to a matmul.
    conv_w = dense((H, in_channels, ps, ps))                         # OIHW
    params["patch_w"] = conv_w.reshape(H, in_channels * ps * ps).T   # (C*ps*ps, H)
    params["patch_b"] = jnp.zeros((1, H), jnp.float32)
    params["cls_token"] = jnp.zeros((1, H), jnp.float32)
    params["pos_emb"] = dense((n_patches + 1, H))
    # Per-omic linear projections to hidden_size (applied in plain XLA).
    params["omics"] = {
        name: {"w": dense((dim, H)), "b": jnp.zeros((H,), jnp.float32)}
        for name, dim in omics_dims.items()
    }
    # Encoder blocks, stacked along a leading num_layers dim; K|V weights fused.
    # Matmul weights are stored in bf16 so the per-layer DMA is halved.
    params["ln1_g"] = jnp.ones((L, 1, H), jnp.float32)
    params["ln1_b"] = jnp.zeros((L, 1, H), jnp.float32)
    params["lnkv_g"] = jnp.ones((L, 1, H), jnp.float32)
    params["lnkv_b"] = jnp.zeros((L, 1, H), jnp.float32)
    params["wq"] = dense((L, H, H)).astype(bf16)
    params["bq"] = jnp.zeros((L, 1, H), jnp.float32)
    params["wkv"] = dense((L, H, 2 * H)).astype(bf16)            # [wk | wv]
    params["bkv"] = jnp.zeros((L, 1, 2 * H), jnp.float32)
    params["wo"] = dense((L, H, H)).astype(bf16)
    params["bo"] = jnp.zeros((L, 1, H), jnp.float32)
    params["ln2_g"] = jnp.ones((L, 1, H), jnp.float32)
    params["ln2_b"] = jnp.zeros((L, 1, H), jnp.float32)
    params["fc1_w"] = dense((L, H, mlp_dim)).astype(bf16)
    params["fc1_b"] = jnp.zeros((L, 1, mlp_dim), jnp.float32)
    params["fc2_w"] = dense((L, mlp_dim, H)).astype(bf16)
    params["fc2_b"] = jnp.zeros((L, 1, H), jnp.float32)
    params["enc_norm_g"] = jnp.ones((1, H), jnp.float32)
    params["enc_norm_b"] = jnp.zeros((1, H), jnp.float32)
    # CATfusion head: mlp (2H->64->16) and head (16->num_classes, Sigmoid).
    params["mlp1_w"] = dense((2 * H, 64))
    params["mlp1_b"] = jnp.zeros((1, 64), jnp.float32)
    params["mlp2_w"] = dense((64, 16))
    params["mlp2_b"] = jnp.zeros((1, 16), jnp.float32)
    params["head_w"] = dense((16, cfg["num_classes"]))
    params["head_b"] = jnp.zeros((1, cfg["num_classes"]), jnp.float32)
    params["output_range"] = jnp.full((1, 1), 8.0, jnp.float32)
    params["output_shift"] = jnp.full((1, 1), -4.0, jnp.float32)
    return params


# ----------------------------------------------------------------------------
# Forward pass
# ----------------------------------------------------------------------------

def cox_loss2(survtime, censor, hazard_pred):
    """Standard Cox partial-likelihood loss (CoxLoss2). Tiny -> plain XLA."""
    theta = hazard_pred.reshape(-1)
    R = (survtime[None, :] >= survtime[:, None]).astype(jnp.float32)
    exp_theta = jnp.exp(theta)
    risk = jnp.log(jnp.sum(exp_theta[None, :] * R, axis=1))
    return -jnp.mean((theta - risk) * censor)


def catfusion_forward(params, wsi, omics_inputs_dict, survtime, censor, cfg):
    H = cfg["hidden_size"]
    nh = cfg["num_heads"]
    dh = H // nh
    ps = cfg["patch_size"]
    L = cfg["num_layers"]
    nc = cfg["num_classes"]

    B, C, Hi, Wi = wsi.shape
    gh, gw = Hi // ps, Wi // ps
    NP = gh * gw
    Sq = NP + 1
    K = C * ps * ps

    # ---- Patch embedding + cls + pos, hoisted to plain XLA (used once) ----
    patches = wsi.reshape(B, C, gh, ps, gw, ps).transpose(0, 2, 4, 1, 3, 5)
    patches = patches.reshape(B, NP, K).astype(jnp.float32)
    pe = jnp.einsum('bpk,kh->bph', patches, params["patch_w"]) + params["patch_b"]
    cls_row = (params["cls_token"] + params["pos_emb"][0:1])[None]        # (1,1,H)
    x0 = jnp.concatenate(
        [jnp.broadcast_to(cls_row, (B, 1, H)), pe + params["pos_emb"][None, 1:]],
        axis=1)                                                            # (B,Sq,H)

    # Omics token embeddings: (B, dim) @ (dim, H) micro-matmuls -> plain XLA
    # (a kernel launch would cost far more than the math).
    names = sorted(omics_inputs_dict.keys())
    omic_tokens = [
        jnp.dot(omics_inputs_dict[n].astype(jnp.float32), params["omics"][n]["w"])
        + params["omics"][n]["b"]
        for n in names
    ]
    text = jnp.stack(omic_tokens, axis=1)                 # (B, Sk, H)

    layer_keys = ("ln1_g", "ln1_b", "lnkv_g", "lnkv_b", "wq", "bq", "wkv", "bkv",
                  "wo", "bo", "ln2_g", "ln2_b", "fc1_w", "fc1_b", "fc2_w", "fc2_b")
    layer_arrs = [params[k] for k in layer_keys]

    batch_spec = lambda arr: pl.BlockSpec((1,) + arr.shape[1:], lambda b, l: (b, 0, 0))
    layer_spec = lambda arr: pl.BlockSpec((1,) + arr.shape[1:], lambda b, l: (l, 0, 0))
    const_spec = lambda arr: pl.BlockSpec(arr.shape, lambda b, l: (0, 0))

    enc_kernel = functools.partial(_encoder_kernel, nh=nh, dh=dh, eps=1e-6)

    x = pl.pallas_call(
        enc_kernel,
        out_shape=jax.ShapeDtypeStruct((B, Sq, H), jnp.float32),
        grid=(B, L),                       # batch parallel, layers sequential
        in_specs=[batch_spec(x0), batch_spec(text)]
                 + [layer_spec(a) for a in layer_arrs]
                 + [const_spec(params["enc_norm_g"]),
                    const_spec(params["enc_norm_b"])],
        out_specs=pl.BlockSpec((1, Sq, H), lambda b, l: (b, 0, 0)),
        scratch_shapes=[pltpu.VMEM((Sq, H), jnp.float32)],   # per-head ctx assembly
        compiler_params=pltpu.CompilerParams(
            dimension_semantics=("parallel", "arbitrary"),
            vmem_limit_bytes=32 * 1024 * 1024),
    )(x0, text, *layer_arrs, params["enc_norm_g"], params["enc_norm_b"])

    # ---- CATfusion head: one small batched kernel, full-array blocks ----
    head_kernel = functools.partial(_head_kernel, H=H)
    logits = pl.pallas_call(
        head_kernel,
        out_shape=jax.ShapeDtypeStruct((B, nc), jnp.float32),
    )(x, params["mlp1_w"], params["mlp1_b"], params["mlp2_w"], params["mlp2_b"],
      params["head_w"], params["head_b"], params["output_range"],
      params["output_shift"])

    loss_cox = cox_loss2(survtime, censor, logits)
    return loss_cox, logits, x


# ----------------------------------------------------------------------------
# Driver
# ----------------------------------------------------------------------------

if __name__ == "__main__":
    cfg = dict(
        hidden_size=32,
        num_heads=4,
        num_layers=2,
        mlp_dim=64,
        patch_size=8,
        img_size=16,
        num_classes=1,   # hazard output consumed by CoxLoss2
    )
    B, C, S = 2, 4, 16
    omics_dims = {"rnaseq": 16, "cnv": 24}

    key = jax.random.PRNGKey(0)
    k_wsi, k_rna, k_cnv, k_st, k_cen, k_par = jax.random.split(key, 6)

    wsi = jax.random.normal(k_wsi, (B, C, S, S), jnp.float32)
    omics_inputs = {
        "rnaseq": jax.random.normal(k_rna, (B, omics_dims["rnaseq"]), jnp.float32),
        "cnv": jax.random.normal(k_cnv, (B, omics_dims["cnv"]), jnp.float32),
    }
    survtime = jax.random.uniform(k_st, (B,), jnp.float32, 0.1, 5.0)
    censor = (jax.random.uniform(k_cen, (B,)) > 0.5).astype(jnp.float32)

    params = init_params(k_par, cfg, omics_dims, C)

    fwd = jax.jit(
        lambda p, w, o, st, cen: catfusion_forward(p, w, o, st, cen, cfg))
    loss_cox, logits, encoded = fwd(params, wsi, omics_inputs, survtime, censor)
    jax.block_until_ready((loss_cox, logits, encoded))

    assert logits.shape == (B, cfg["num_classes"])
    assert encoded.shape == (B, (S // cfg["patch_size"]) ** 2 + 1, cfg["hidden_size"])
    assert bool(jnp.isfinite(loss_cox))
    print("KERNEL_OK")
</pallas_src>

<mosaic_0001>
module attributes {stable_mosaic.version = 11 : i64} {
  func.func @_head_kernel(%arg0: memref<2x5x32xf32, #tpu.memory_space<vmem>>, %arg1: memref<64x64xf32, #tpu.memory_space<vmem>>, %arg2: memref<1x64xf32, #tpu.memory_space<vmem>>, %arg3: memref<64x16xf32, #tpu.memory_space<vmem>>, %arg4: memref<1x16xf32, #tpu.memory_space<vmem>>, %arg5: memref<16x1xf32, #tpu.memory_space<vmem>>, %arg6: memref<1x1xf32, #tpu.memory_space<vmem>>, %arg7: memref<1x1xf32, #tpu.memory_space<vmem>>, %arg8: memref<1x1xf32, #tpu.memory_space<vmem>>, %arg9: memref<2x1xf32, #tpu.memory_space<vmem>>) attributes {dimension_semantics = [], scalar_prefetch = 0 : i64, scratch_operands = 0 : i64, tpu.core_type = #tpu.core_type<tc>} {
    %c0 = arith.constant 0 : index
    %c0_0 = arith.constant 0 : index
    %c0_1 = arith.constant 0 : index
    %0 = vector.load %arg0[%c0, %c0_0, %c0_1] : memref<2x5x32xf32, #tpu.memory_space<vmem>>, vector<2x5x32xf32>
    %1 = vector.extract_strided_slice %0 {offsets = [0, 0, 0], sizes = [2, 1, 32], strides = [1, 1, 1]} : vector<2x5x32xf32> to vector<2x1x32xf32>
    %2 = vector.shape_cast %1 : vector<2x1x32xf32> to vector<2x32xf32>
    %3 = vector.extract_strided_slice %0 {offsets = [0, 1, 0], sizes = [2, 4, 32], strides = [1, 1, 1]} : vector<2x5x32xf32> to vector<2x4x32xf32>
    %cst = arith.constant dense<0.000000e+00> : vector<2x32xf32>
    %4 = vector.multi_reduction <add>, %3, %cst [1] : vector<2x4x32xf32> to vector<2x32xf32>
    %cst_2 = arith.constant 4.000000e+00 : f32
    %5 = vector.broadcast %cst_2 : f32 to vector<2x32xf32>
    %6 = arith.divf %4, %5 : vector<2x32xf32>
    %c0_3 = arith.constant 0 : index
    %c0_4 = arith.constant 0 : index
    %7 = vector.load %arg1[%c0_3, %c0_4] : memref<64x64xf32, #tpu.memory_space<vmem>>, vector<64x64xf32>
    %8 = vector.extract_strided_slice %7 {offsets = [0, 0], sizes = [32, 64], strides = [1, 1]} : vector<64x64xf32> to vector<32x64xf32>
    %cst_5 = arith.constant dense<0.000000e+00> : vector<2x64xf32>
    %9 = tpu.matmul %2, %8, %cst_5 {dimension_numbers = #tpu.dot_dimension_numbers<[1], [0], [0], [1], [0, 0, 1, 1], [], []>} : vector<2x32xf32>, vector<32x64xf32>, vector<2x64xf32> -> vector<2x64xf32>
    %10 = vector.extract_strided_slice %7 {offsets = [32, 0], sizes = [32, 64], strides = [1, 1]} : vector<64x64xf32> to vector<32x64xf32>
    %cst_6 = arith.constant dense<0.000000e+00> : vector<2x64xf32>
    %11 = tpu.matmul %6, %10, %cst_6 {dimension_numbers = #tpu.dot_dimension_numbers<[1], [0], [0], [1], [0, 0, 1, 1], [], []>} : vector<2x32xf32>, vector<32x64xf32>, vector<2x64xf32> -> vector<2x64xf32>
    %12 = arith.addf %9, %11 : vector<2x64xf32>
    %c0_7 = arith.constant 0 : index
    %c0_8 = arith.constant 0 : index
    %13 = vector.load %arg2[%c0_7, %c0_8] : memref<1x64xf32, #tpu.memory_space<vmem>>, vector<1x64xf32>
    %14 = vector.broadcast %13 : vector<1x64xf32> to vector<2x64xf32>
    %15 = arith.addf %12, %14 : vector<2x64xf32>
    %cst_9 = arith.constant 0.000000e+00 : f32
    %16 = vector.broadcast %cst_9 : f32 to vector<2x64xf32>
    %17 = arith.maximumf %15, %16 : vector<2x64xf32>
    %c0_10 = arith.constant 0 : index
    %c0_11 = arith.constant 0 : index
    %18 = vector.load %arg3[%c0_10, %c0_11] : memref<64x16xf32, #tpu.memory_space<vmem>>, vector<64x16xf32>
    %cst_12 = arith.constant dense<0.000000e+00> : vector<2x16xf32>
    %19 = tpu.matmul %17, %18, %cst_12 {dimension_numbers = #tpu.dot_dimension_numbers<[1], [0], [0], [1], [0, 0, 1, 1], [], []>} : vector<2x64xf32>, vector<64x16xf32>, vector<2x16xf32> -> vector<2x16xf32>
    %c0_13 = arith.constant 0 : index
    %c0_14 = arith.constant 0 : index
    %20 = vector.load %arg4[%c0_13, %c0_14] : memref<1x16xf32, #tpu.memory_space<vmem>>, vector<1x16xf32>
    %21 = vector.broadcast %20 : vector<1x16xf32> to vector<2x16xf32>
    %22 = arith.addf %19, %21 : vector<2x16xf32>
    %cst_15 = arith.constant 0.000000e+00 : f32
    %23 = vector.broadcast %cst_15 : f32 to vector<2x16xf32>
    %24 = arith.maximumf %22, %23 : vector<2x16xf32>
    %c0_16 = arith.constant 0 : index
    %c0_17 = arith.constant 0 : index
    %25 = vector.load %arg5[%c0_16, %c0_17] : memref<16x1xf32, #tpu.memory_space<vmem>>, vector<16x1xf32>
    %cst_18 = arith.constant dense<0.000000e+00> : vector<2x1xf32>
    %26 = tpu.matmul %24, %25, %cst_18 {dimension_numbers = #tpu.dot_dimension_numbers<[1], [0], [0], [1], [0, 0, 1, 1], [], []>} : vector<2x16xf32>, vector<16x1xf32>, vector<2x1xf32> -> vector<2x1xf32>
    %c0_19 = arith.constant 0 : index
    %c0_20 = arith.constant 0 : index
    %27 = vector.load %arg6[%c0_19, %c0_20] : memref<1x1xf32, #tpu.memory_space<vmem>>, vector<1x1xf32>
    %28 = vector.broadcast %27 : vector<1x1xf32> to vector<2x1xf32>
    %29 = arith.addf %26, %28 : vector<2x1xf32>
    %30 = arith.negf %29 : vector<2x1xf32>
    %31 = math.exp %30 : vector<2x1xf32>
    %cst_21 = arith.constant 1.000000e+00 : f32
    %32 = vector.broadcast %cst_21 : f32 to vector<2x1xf32>
    %33 = arith.addf %32, %31 : vector<2x1xf32>
    %34 = arith.divf %32, %33 : vector<2x1xf32>
    %c0_22 = arith.constant 0 : index
    %c0_23 = arith.constant 0 : index
    %35 = vector.load %arg7[%c0_22, %c0_23] : memref<1x1xf32, #tpu.memory_space<vmem>>, vector<1x1xf32>
    %36 = vector.broadcast %35 : vector<1x1xf32> to vector<2x1xf32>
    %37 = arith.mulf %34, %36 : vector<2x1xf32>
    %c0_24 = arith.constant 0 : index
    %c0_25 = arith.constant 0 : index
    %38 = vector.load %arg8[%c0_24, %c0_25] : memref<1x1xf32, #tpu.memory_space<vmem>>, vector<1x1xf32>
    %39 = vector.broadcast %38 : vector<1x1xf32> to vector<2x1xf32>
    %40 = arith.addf %37, %39 : vector<2x1xf32>
    %c0_26 = arith.constant 0 : index
    %c0_27 = arith.constant 0 : index
    %41 = vector.load %arg9[%c0_26, %c0_27] : memref<2x1xf32, #tpu.memory_space<vmem>>, vector<2x1xf32>
    tpu.vector_store %arg9[%c0_26, %c0_27], %40 {strides = array<i32>} : memref<2x1xf32, #tpu.memory_space<vmem>>, vector<2x1xf32>,
    return
  }
}

module attributes {stable_mosaic.version = 11 : i64} {
  func.func @_encoder_kernel(%arg0: i32, %arg1: i32, %arg2: memref<1x5x32xf32, #tpu.memory_space<vmem>>, %arg3: memref<1x2x32xf32, #tpu.memory_space<vmem>>, %arg4: memref<1x1x32xf32, #tpu.memory_space<vmem>>, %arg5: memref<1x1x32xf32, #tpu.memory_space<vmem>>, %arg6: memref<1x1x32xf32, #tpu.memory_space<vmem>>, %arg7: memref<1x1x32xf32, #tpu.memory_space<vmem>>, %arg8: memref<1x32x32xbf16, #tpu.memory_space<vmem>>, %arg9: memref<1x1x32xf32, #tpu.memory_space<vmem>>, %arg10: memref<1x32x64xbf16, #tpu.memory_space<vmem>>, %arg11: memref<1x1x64xf32, #tpu.memory_space<vmem>>, %arg12: memref<1x32x32xbf16, #tpu.memory_space<vmem>>, %arg13: memref<1x1x32xf32, #tpu.memory_space<vmem>>, %arg14: memref<1x1x32xf32, #tpu.memory_space<vmem>>, %arg15: memref<1x1x32xf32, #tpu.memory_space<vmem>>, %arg16: memref<1x32x64xbf16, #tpu.memory_space<vmem>>, %arg17: memref<1x1x64xf32, #tpu.memory_space<vmem>>, %arg18: memref<1x64x32xbf16, #tpu.memory_space<vmem>>, %arg19: memref<1x1x32xf32, #tpu.memory_space<vmem>>, %arg20: memref<1x32xf32, #tpu.memory_space<vmem>>, %arg21: memref<1x32xf32, #tpu.memory_space<vmem>>, %arg22: memref<1x5x32xf32, #tpu.memory_space<vmem>>, %arg23: memref<5x32xf32, #tpu.memory_space<vmem>>) attributes {dimension_semantics = [#tpu.dimension_semantics<parallel>, #tpu.dimension_semantics<arbitrary>], iteration_bounds = array<i64: 2, 2>, scalar_prefetch = 0 : i64, scratch_operands = 1 : i64, tpu.core_type = #tpu.core_type<tc>, window_params = [{transform_indices = @transform_0, window_bounds = array<i64: 1, 5, 32>}, {transform_indices = @transform_1, window_bounds = array<i64: 1, 2, 32>}, {transform_indices = @transform_2, window_bounds = array<i64: 1, 1, 32>}, {transform_indices = @transform_3, window_bounds = array<i64: 1, 1, 32>}, {transform_indices = @transform_4, window_bounds = array<i64: 1, 1, 32>}, {transform_indices = @transform_5, window_bounds = array<i64: 1, 1, 32>}, {transform_indices = @transform_6, window_bounds = array<i64: 1, 32, 32>}, {transform_indices = @transform_7, window_bounds = array<i64: 1, 1, 32>}, {transform_indices = @transform_8, window_bounds = array<i64: 1, 32, 64>}, {transform_indices = @transform_9, window_bounds = array<i64: 1, 1, 64>}, {transform_indices = @transform_10, window_bounds = array<i64: 1, 32, 32>}, {transform_indices = @transform_11, window_bounds = array<i64: 1, 1, 32>}, {transform_indices = @transform_12, window_bounds = array<i64: 1, 1, 32>}, {transform_indices = @transform_13, window_bounds = array<i64: 1, 1, 32>}, {transform_indices = @transform_14, window_bounds = array<i64: 1, 32, 64>}, {transform_indices = @transform_15, window_bounds = array<i64: 1, 1, 64>}, {transform_indices = @transform_16, window_bounds = array<i64: 1, 64, 32>}, {transform_indices = @transform_17, window_bounds = array<i64: 1, 1, 32>}, {pipeline_mode = #tpu.pipeline_mode<synchronous>, transform_indices = @transform_18, window_bounds = array<i64: 1, 32>}, {pipeline_mode = #tpu.pipeline_mode<synchronous>, transform_indices = @transform_19, window_bounds = array<i64: 1, 32>}, {transform_indices = @transform_20, window_bounds = array<i64: 1, 5, 32>}]} {
    %c0_i32 = arith.constant 0 : i32
    %0 = arith.cmpi eq, %arg1, %c0_i32 : i32
    %1 = arith.extui %0 : i1 to i32
    %c0_i32_0 = arith.constant 0 : i32
    %2 = arith.cmpi ne, %1, %c0_i32_0 : i32
    scf.if %2 {
      %c0_93 = arith.constant 0 : index
      %c0_94 = arith.constant 0 : index
      %c0_95 = arith.constant 0 : index
      %210 = vector.load %arg2[%c0_93, %c0_94, %c0_95] : memref<1x5x32xf32, #tpu.memory_space<vmem>>, vector<1x5x32xf32>
      %211 = vector.shape_cast %210 : vector<1x5x32xf32> to vector<5x32xf32>
      %c0_96 = arith.constant 0 : index
      %c0_97 = arith.constant 0 : index
      %c0_98 = arith.constant 0 : index
      %212 = vector.load %arg22[%c0_96, %c0_97, %c0_98] : memref<1x5x32xf32, #tpu.memory_space<vmem>>, vector<1x5x32xf32>
      %213 = vector.shape_cast %212 : vector<1x5x32xf32> to vector<5x32xf32>
      %214 = vector.shape_cast %211 : vector<5x32xf32> to vector<1x5x32xf32>
      tpu.vector_store %arg22[%c0_96, %c0_97, %c0_98], %214 {strides = array<i32>} : memref<1x5x32xf32, #tpu.memory_space<vmem>>, vector<1x5x32xf32>,
    } else {
    }
    %c0 = arith.constant 0 : index
    %c0_1 = arith.constant 0 : index
    %c0_2 = arith.constant 0 : index
    %3 = vector.load %arg22[%c0, %c0_1, %c0_2] : memref<1x5x32xf32, #tpu.memory_space<vmem>>, vector<1x5x32xf32>
    %4 = vector.shape_cast %3 : vector<1x5x32xf32> to vector<5x32xf32>
    %c0_3 = arith.constant 0 : index
    %c0_4 = arith.constant 0 : index
    %c0_5 = arith.constant 0 : index
    %5 = vector.load %arg3[%c0_3, %c0_4, %c0_5] : memref<1x2x32xf32, #tpu.memory_space<vmem>>, vector<1x2x32xf32>
    %6 = vector.shape_cast %5 : vector<1x2x32xf32> to vector<2x32xf32>
    %c0_6 = arith.constant 0 : index
    %c0_7 = arith.constant 0 : index
    %c0_8 = arith.constant 0 : index
    %7 = vector.load %arg4[%c0_6, %c0_7, %c0_8] : memref<1x1x32xf32, #tpu.memory_space<vmem>>, vector<1x1x32xf32>
    %8 = vector.shape_cast %7 : vector<1x1x32xf32> to vector<1x32xf32>
    %c0_9 = arith.constant 0 : index
    %c0_10 = arith.constant 0 : index
    %c0_11 = arith.constant 0 : index
    %9 = vector.load %arg5[%c0_9, %c0_10, %c0_11] : memref<1x1x32xf32, #tpu.memory_space<vmem>>, vector<1x1x32xf32>
    %10 = vector.shape_cast %9 : vector<1x1x32xf32> to vector<1x32xf32>
    %cst = arith.constant dense<0.000000e+00> : vector<5xf32>
    %11 = vector.multi_reduction <add>, %4, %cst [1] : vector<5x32xf32> to vector<5xf32>
    %12 = vector.shape_cast %11 : vector<5xf32> to vector<5x1xf32>
    %cst_12 = arith.constant 3.200000e+01 : f32
    %13 = vector.broadcast %cst_12 : f32 to vector<5x1xf32>
    %14 = arith.divf %12, %13 : vector<5x1xf32>
    %15 = vector.broadcast %14 : vector<5x1xf32> to vector<5x32xf32>
    %16 = arith.subf %4, %15 : vector<5x32xf32>
    %17 = vector.broadcast %14 : vector<5x1xf32> to vector<5x32xf32>
    %18 = arith.subf %4, %17 : vector<5x32xf32>
    %19 = arith.mulf %16, %18 : vector<5x32xf32>
    %cst_13 = arith.constant dense<0.000000e+00> : vector<5xf32>
    %20 = vector.multi_reduction <add>, %19, %cst_13 [1] : vector<5x32xf32> to vector<5xf32>
    %21 = vector.shape_cast %20 : vector<5xf32> to vector<5x1xf32>
    %cst_14 = arith.constant 3.200000e+01 : f32
    %22 = vector.broadcast %cst_14 : f32 to vector<5x1xf32>
    %23 = arith.divf %21, %22 : vector<5x1xf32>
    %24 = vector.broadcast %14 : vector<5x1xf32> to vector<5x32xf32>
    %25 = arith.subf %4, %24 : vector<5x32xf32>
    %cst_15 = arith.constant 9.99999997E-7 : f32
    %26 = vector.broadcast %cst_15 : f32 to vector<5x1xf32>
    %27 = arith.addf %23, %26 : vector<5x1xf32>
    %28 = math.rsqrt %27 : vector<5x1xf32>
    %29 = vector.broadcast %28 : vector<5x1xf32> to vector<5x32xf32>
    %30 = arith.mulf %25, %29 : vector<5x32xf32>
    %31 = vector.broadcast %8 : vector<1x32xf32> to vector<5x32xf32>
    %32 = arith.mulf %30, %31 : vector<5x32xf32>
    %33 = vector.broadcast %10 : vector<1x32xf32> to vector<5x32xf32>
    %34 = arith.addf %32, %33 : vector<5x32xf32>
    %35 = arith.truncf %34 : vector<5x32xf32> to vector<5x32xbf16>
    %c0_16 = arith.constant 0 : index
    %c0_17 = arith.constant 0 : index
    %c0_18 = arith.constant 0 : index
    %36 = vector.load %arg6[%c0_16, %c0_17, %c0_18] : memref<1x1x32xf32, #tpu.memory_space<vmem>>, vector<1x1x32xf32>
    %37 = vector.shape_cast %36 : vector<1x1x32xf32> to vector<1x32xf32>
    %c0_19 = arith.constant 0 : index
    %c0_20 = arith.constant 0 : index
    %c0_21 = arith.constant 0 : index
    %38 = vector.load %arg7[%c0_19, %c0_20, %c0_21] : memref<1x1x32xf32, #tpu.memory_space<vmem>>, vector<1x1x32xf32>
    %39 = vector.shape_cast %38 : vector<1x1x32xf32> to vector<1x32xf32>
    %cst_22 = arith.constant dense<0.000000e+00> : vector<2xf32>
    %40 = vector.multi_reduction <add>, %6, %cst_22 [1] : vector<2x32xf32> to vector<2xf32>
    %41 = vector.shape_cast %40 : vector<2xf32> to vector<2x1xf32>
    %cst_23 = arith.constant 3.200000e+01 : f32
    %42 = vector.broadcast %cst_23 : f32 to vector<2x1xf32>
    %43 = arith.divf %41, %42 : vector<2x1xf32>
    %44 = vector.broadcast %43 : vector<2x1xf32> to vector<2x32xf32>
    %45 = arith.subf %6, %44 : vector<2x32xf32>
    %46 = vector.broadcast %43 : vector<2x1xf32> to vector<2x32xf32>
    %47 = arith.subf %6, %46 : vector<2x32xf32>
    %48 = arith.mulf %45, %47 : vector<2x32xf32>
    %cst_24 = arith.constant dense<0.000000e+00> : vector<2xf32>
    %49 = vector.multi_reduction <add>, %48, %cst_24 [1] : vector<2x32xf32> to vector<2xf32>
    %50 = vector.shape_cast %49 : vector<2xf32> to vector<2x1xf32>
    %cst_25 = arith.constant 3.200000e+01 : f32
    %51 = vector.broadcast %cst_25 : f32 to vector<2x1xf32>
    %52 = arith.divf %50, %51 : vector<2x1xf32>
    %53 = vector.broadcast %43 : vector<2x1xf32> to vector<2x32xf32>
    %54 = arith.subf %6, %53 : vector<2x32xf32>
    %cst_26 = arith.constant 9.99999997E-7 : f32
    %55 = vector.broadcast %cst_26 : f32 to vector<2x1xf32>
    %56 = arith.addf %52, %55 : vector<2x1xf32>
    %57 = math.rsqrt %56 : vector<2x1xf32>
    %58 = vector.broadcast %57 : vector<2x1xf32> to vector<2x32xf32>
    %59 = arith.mulf %54, %58 : vector<2x32xf32>
    %60 = vector.broadcast %37 : vector<1x32xf32> to vector<2x32xf32>
    %61 = arith.mulf %59, %60 : vector<2x32xf32>
    %62 = vector.broadcast %39 : vector<1x32xf32> to vector<2x32xf32>
    %63 = arith.addf %61, %62 : vector<2x32xf32>
    %64 = arith.truncf %63 : vector<2x32xf32> to vector<2x32xbf16>
    %c0_27 = arith.constant 0 : index
    %c0_28 = arith.constant 0 : index
    %c0_29 = arith.constant 0 : index
    %65 = vector.load %arg8[%c0_27, %c0_28, %c0_29] : memref<1x32x32xbf16, #tpu.memory_space<vmem>>, vector<1x32x32xbf16>
    %66 = vector.shape_cast %65 : vector<1x32x32xbf16> to vector<32x32xbf16>
    %cst_30 = arith.constant dense<0.000000e+00> : vector<5x32xf32>
    %67 = tpu.matmul %35, %66, %cst_30 {dimension_numbers = #tpu.dot_dimension_numbers<[1], [0], [0], [1], [0, 0, 1, 1], [], []>} : vector<5x32xbf16>, vector<32x32xbf16>, vector<5x32xf32> -> vector<5x32xf32>
    %c0_31 = arith.constant 0 : index
    %c0_32 = arith.constant 0 : index
    %c0_33 = arith.constant 0 : index
    %68 = vector.load %arg9[%c0_31, %c0_32, %c0_33] : memref<1x1x32xf32, #tpu.memory_space<vmem>>, vector<1x1x32xf32>
    %69 = vector.shape_cast %68 : vector<1x1x32xf32> to vector<1x32xf32>
    %70 = vector.broadcast %69 : vector<1x32xf32> to vector<5x32xf32>
    %71 = arith.addf %67, %70 : vector<5x32xf32>
    %c0_34 = arith.constant 0 : index
    %c0_35 = arith.constant 0 : index
    %c0_36 = arith.constant 0 : index
    %72 = vector.load %arg10[%c0_34, %c0_35, %c0_36] : memref<1x32x64xbf16, #tpu.memory_space<vmem>>, vector<1x32x64xbf16>
    %73 = vector.shape_cast %72 : vector<1x32x64xbf16> to vector<32x64xbf16>
    %cst_37 = arith.constant dense<0.000000e+00> : vector<2x64xf32>
    %74 = tpu.matmul %64, %73, %cst_37 {dimension_numbers = #tpu.dot_dimension_numbers<[1], [0], [0], [1], [0, 0, 1, 1], [], []>} : vector<2x32xbf16>, vector<32x64xbf16>, vector<2x64xf32> -> vector<2x64xf32>
    %c0_38 = arith.constant 0 : index
    %c0_39 = arith.constant 0 : index
    %c0_40 = arith.constant 0 : index
    %75 = vector.load %arg11[%c0_38, %c0_39, %c0_40] : memref<1x1x64xf32, #tpu.memory_space<vmem>>, vector<1x1x64xf32>
    %76 = vector.shape_cast %75 : vector<1x1x64xf32> to vector<1x64xf32>
    %77 = vector.broadcast %76 : vector<1x64xf32> to vector<2x64xf32>
    %78 = arith.addf %74, %77 : vector<2x64xf32>
    %79 = vector.extract_strided_slice %71 {offsets = [0, 0], sizes = [5, 8], strides = [1, 1]} : vector<5x32xf32> to vector<5x8xf32>
    %80 = vector.extract_strided_slice %71 {offsets = [0, 8], sizes = [5, 8], strides = [1, 1]} : vector<5x32xf32> to vector<5x8xf32>
    %81 = vector.extract_strided_slice %71 {offsets = [0, 16], sizes = [5, 8], strides = [1, 1]} : vector<5x32xf32> to vector<5x8xf32>
    %82 = vector.extract_strided_slice %71 {offsets = [0, 24], sizes = [5, 8], strides = [1, 1]} : vector<5x32xf32> to vector<5x8xf32>
    %83 = vector.shape_cast %79 : vector<5x8xf32> to vector<1x5x8xf32>
    %84 = vector.shape_cast %80 : vector<5x8xf32> to vector<1x5x8xf32>
    %85 = vector.shape_cast %81 : vector<5x8xf32> to vector<1x5x8xf32>
    %86 = vector.shape_cast %82 : vector<5x8xf32> to vector<1x5x8xf32>
    %87 = tpu.concatenate %83, %84, %85, %86 in 0 : vector<1x5x8xf32>, vector<1x5x8xf32>, vector<1x5x8xf32>, vector<1x5x8xf32> -> vector<4x5x8xf32>
    %88 = arith.truncf %87 : vector<4x5x8xf32> to vector<4x5x8xbf16>
    %89 = vector.extract_strided_slice %78 {offsets = [0, 0], sizes = [2, 8], strides = [1, 1]} : vector<2x64xf32> to vector<2x8xf32>
    %90 = vector.extract_strided_slice %78 {offsets = [0, 8], sizes = [2, 8], strides = [1, 1]} : vector<2x64xf32> to vector<2x8xf32>
    %91 = vector.extract_strided_slice %78 {offsets = [0, 16], sizes = [2, 8], strides = [1, 1]} : vector<2x64xf32> to vector<2x8xf32>
    %92 = vector.extract_strided_slice %78 {offsets = [0, 24], sizes = [2, 8], strides = [1, 1]} : vector<2x64xf32> to vector<2x8xf32>
    %93 = vector.shape_cast %89 : vector<2x8xf32> to vector<1x2x8xf32>
    %94 = vector.shape_cast %90 : vector<2x8xf32> to vector<1x2x8xf32>
    %95 = vector.shape_cast %91 : vector<2x8xf32> to vector<1x2x8xf32>
    %96 = vector.shape_cast %92 : vector<2x8xf32> to vector<1x2x8xf32>
    %97 = tpu.concatenate %93, %94, %95, %96 in 0 : vector<1x2x8xf32>, vector<1x2x8xf32>, vector<1x2x8xf32>, vector<1x2x8xf32> -> vector<4x2x8xf32>
    %98 = arith.truncf %97 : vector<4x2x8xf32> to vector<4x2x8xbf16>
    %99 = vector.extract_strided_slice %78 {offsets = [0, 32], sizes = [2, 8], strides = [1, 1]} : vector<2x64xf32> to vector<2x8xf32>
    %100 = vector.extract_strided_slice %78 {offsets = [0, 40], sizes = [2, 8], strides = [1, 1]} : vector<2x64xf32> to vector<2x8xf32>
    %101 = vector.extract_strided_slice %78 {offsets = [0, 48], sizes = [2, 8], strides = [1, 1]} : vector<2x64xf32> to vector<2x8xf32>
    %102 = vector.extract_strided_slice %78 {offsets = [0, 56], sizes = [2, 8], strides = [1, 1]} : vector<2x64xf32> to vector<2x8xf32>
    %103 = vector.shape_cast %99 : vector<2x8xf32> to vector<1x2x8xf32>
    %104 = vector.shape_cast %100 : vector<2x8xf32> to vector<1x2x8xf32>
    %105 = vector.shape_cast %101 : vector<2x8xf32> to vector<1x2x8xf32>
    %106 = vector.shape_cast %102 : vector<2x8xf32> to vector<1x2x8xf32>
    %107 = tpu.concatenate %103, %104, %105, %106 in 0 : vector<1x2x8xf32>, vector<1x2x8xf32>, vector<1x2x8xf32>, vector<1x2x8xf32> -> vector<4x2x8xf32>
    %108 = arith.truncf %107 : vector<4x2x8xf32> to vector<4x2x8xbf16>
    "tpu.trace_start"() <{level = 10 : i32, message = "hqd,hkd->hqk"}> : () -> ()
    %cst_41 = arith.constant dense<0.000000e+00> : vector<4x5x2xf32>
    %109 = tpu.matmul %88, %98, %cst_41 {dimension_numbers = #tpu.dot_dimension_numbers<[2], [2], [1], [1], [0, 0, 0, 1, 1, 1], [0], [0]>} : vector<4x5x8xbf16>, vector<4x2x8xbf16>, vector<4x5x2xf32> -> vector<4x5x2xf32>
    "tpu.trace_stop"() : () -> ()
    %cst_42 = arith.constant 0.353553385 : f32
    %110 = vector.broadcast %cst_42 : f32 to vector<4x5x2xf32>
    %111 = arith.mulf %109, %110 : vector<4x5x2xf32>
    %cst_43 = arith.constant dense<0xFF800000> : vector<4x5xf32>
    %112 = vector.multi_reduction <maximumf>, %111, %cst_43 [2] : vector<4x5x2xf32> to vector<4x5xf32>
    %113 = vector.shape_cast %112 : vector<4x5xf32> to vector<4x5x1xf32>
    %114 = vector.broadcast %113 : vector<4x5x1xf32> to vector<4x5x2xf32>
    %115 = arith.subf %111, %114 : vector<4x5x2xf32>
    %116 = math.exp %115 : vector<4x5x2xf32>
    %cst_44 = arith.constant dense<0.000000e+00> : vector<4x5xf32>
    %117 = vector.multi_reduction <add>, %116, %cst_44 [2] : vector<4x5x2xf32> to vector<4x5xf32>
    %118 = vector.shape_cast %117 : vector<4x5xf32> to vector<4x5x1xf32>
    %119 = tpu.reciprocal %118 {approx = true} : vector<4x5x1xf32> -> vector<4x5x1xf32>
    %120 = vector.broadcast %119 : vector<4x5x1xf32> to vector<4x5x2xf32>
    %121 = arith.mulf %116, %120 : vector<4x5x2xf32>
    %122 = arith.truncf %121 : vector<4x5x2xf32> to vector<4x5x2xbf16>
    "tpu.trace_start"() <{level = 10 : i32, message = "hqk,hkd->hqd"}> : () -> ()
    %cst_45 = arith.constant dense<0.000000e+00> : vector<4x5x8xf32>
    %123 = tpu.matmul %122, %108, %cst_45 {dimension_numbers = #tpu.dot_dimension_numbers<[2], [1], [1], [2], [0, 0, 0, 1, 1, 2], [0], [0]>} : vector<4x5x2xbf16>, vector<4x2x8xbf16>, vector<4x5x8xf32> -> vector<4x5x8xf32>
    "tpu.trace_stop"() : () -> ()
    %124 = vector.extract_strided_slice %123 {offsets = [0, 0, 0], sizes = [1, 5, 8], strides = [1, 1, 1]} : vector<4x5x8xf32> to vector<1x5x8xf32>
    %125 = vector.shape_cast %124 : vector<1x5x8xf32> to vector<5x8xf32>
    %c0_46 = arith.constant 0 : index
    %c0_47 = arith.constant 0 : index
    %126 = vector.load %arg23[%c0_46, %c0_47] : memref<5x32xf32, #tpu.memory_space<vmem>>, vector<5x8xf32>
    tpu.vector_store %arg23[%c0_46, %c0_47], %125 {strides = array<i32>} : memref<5x32xf32, #tpu.memory_space<vmem>>, vector<5x8xf32>,
    %127 = vector.extract_strided_slice %123 {offsets = [1, 0, 0], sizes = [1, 5, 8], strides = [1, 1, 1]} : vector<4x5x8xf32> to vector<1x5x8xf32>
    %128 = vector.shape_cast %127 : vector<1x5x8xf32> to vector<5x8xf32>
    %c0_48 = arith.constant 0 : index
    %c8 = arith.constant 8 : index
    %129 = vector.load %arg23[%c0_48, %c8] : memref<5x32xf32, #tpu.memory_space<vmem>>, vector<5x8xf32>
    tpu.vector_store %arg23[%c0_48, %c8], %128 {strides = array<i32>} : memref<5x32xf32, #tpu.memory_space<vmem>>, vector<5x8xf32>,
    %130 = vector.extract_strided_slice %123 {offsets = [2, 0, 0], sizes = [1, 5, 8], strides = [1, 1, 1]} : vector<4x5x8xf32> to vector<1x5x8xf32>
    %131 = vector.shape_cast %130 : vector<1x5x8xf32> to vector<5x8xf32>
    %c0_49 = arith.constant 0 : index
    %c16 = arith.constant 16 : index
    %132 = vector.load %arg23[%c0_49, %c16] : memref<5x32xf32, #tpu.memory_space<vmem>>, vector<5x8xf32>
    tpu.vector_store %arg23[%c0_49, %c16], %131 {strides = array<i32>} : memref<5x32xf32, #tpu.memory_space<vmem>>, vector<5x8xf32>,
    %133 = vector.extract_strided_slice %123 {offsets = [3, 0, 0], sizes = [1, 5, 8], strides = [1, 1, 1]} : vector<4x5x8xf32> to vector<1x5x8xf32>
    %134 = vector.shape_cast %133 : vector<1x5x8xf32> to vector<5x8xf32>
    %c0_50 = arith.constant 0 : index
    %c24 = arith.constant 24 : index
    %135 = vector.load %arg23[%c0_50, %c24] : memref<5x32xf32, #tpu.memory_space<vmem>>, vector<5x8xf32>
    tpu.vector_store %arg23[%c0_50, %c24], %134 {strides = array<i32>} : memref<5x32xf32, #tpu.memory_space<vmem>>, vector<5x8xf32>,
    %c0_51 = arith.constant 0 : index
    %c0_52 = arith.constant 0 : index
    %136 = vector.load %arg23[%c0_51, %c0_52] : memref<5x32xf32, #tpu.memory_space<vmem>>, vector<5x32xf32>
    %137 = arith.truncf %136 : vector<5x32xf32> to vector<5x32xbf16>
    %c0_53 = arith.constant 0 : index
    %c0_54 = arith.constant 0 : index
    %c0_55 = arith.constant 0 : index
    %138 = vector.load %arg12[%c0_53, %c0_54, %c0_55] : memref<1x32x32xbf16, #tpu.memory_space<vmem>>, vector<1x32x32xbf16>
    %139 = vector.shape_cast %138 : vector<1x32x32xbf16> to vector<32x32xbf16>
    %cst_56 = arith.constant dense<0.000000e+00> : vector<5x32xf32>
    %140 = tpu.matmul %137, %139, %cst_56 {dimension_numbers = #tpu.dot_dimension_numbers<[1], [0], [0], [1], [0, 0, 1, 1], [], []>} : vector<5x32xbf16>, vector<32x32xbf16>, vector<5x32xf32> -> vector<5x32xf32>
    %c0_57 = arith.constant 0 : index
    %c0_58 = arith.constant 0 : index
    %c0_59 = arith.constant 0 : index
    %141 = vector.load %arg13[%c0_57, %c0_58, %c0_59] : memref<1x1x32xf32, #tpu.memory_space<vmem>>, vector<1x1x32xf32>
    %142 = vector.shape_cast %141 : vector<1x1x32xf32> to vector<1x32xf32>
    %143 = vector.broadcast %142 : vector<1x32xf32> to vector<5x32xf32>
    %144 = arith.addf %140, %143 : vector<5x32xf32>
    %145 = arith.addf %4, %144 : vector<5x32xf32>
    %c0_60 = arith.constant 0 : index
    %c0_61 = arith.constant 0 : index
    %c0_62 = arith.constant 0 : index
    %146 = vector.load %arg14[%c0_60, %c0_61, %c0_62] : memref<1x1x32xf32, #tpu.memory_space<vmem>>, vector<1x1x32xf32>
    %147 = vector.shape_cast %146 : vector<1x1x32xf32> to vector<1x32xf32>
    %c0_63 = arith.constant 0 : index
    %c0_64 = arith.constant 0 : index
    %c0_65 = arith.constant 0 : index
    %148 = vector.load %arg15[%c0_63, %c0_64, %c0_65] : memref<1x1x32xf32, #tpu.memory_space<vmem>>, vector<1x1x32xf32>
    %149 = vector.shape_cast %148 : vector<1x1x32xf32> to vector<1x32xf32>
    %cst_66 = arith.constant dense<0.000000e+00> : vector<5xf32>
    %150 = vector.multi_reduction <add>, %145, %cst_66 [1] : vector<5x32xf32> to vector<5xf32>
    %151 = vector.shape_cast %150 : vector<5xf32> to vector<5x1xf32>
    %cst_67 = arith.constant 3.200000e+01 : f32
    %152 = vector.broadcast %cst_67 : f32 to vector<5x1xf32>
    %153 = arith.divf %151, %152 : vector<5x1xf32>
    %154 = vector.broadcast %153 : vector<5x1xf32> to vector<5x32xf32>
    %155 = arith.subf %145, %154 : vector<5x32xf32>
    %156 = vector.broadcast %153 : vector<5x1xf32> to vector<5x32xf32>
    %157 = arith.subf %145, %156 : vector<5x32xf32>
    %158 = arith.mulf %155, %157 : vector<5x32xf32>
    %cst_68 = arith.constant dense<0.000000e+00> : vector<5xf32>
    %159 = vector.multi_reduction <add>, %158, %cst_68 [1] : vector<5x32xf32> to vector<5xf32>
    %160 = vector.shape_cast %159 : vector<5xf32> to vector<5x1xf32>
    %cst_69 = arith.constant 3.200000e+01 : f32
    %161 = vector.broadcast %cst_69 : f32 to vector<5x1xf32>
    %162 = arith.divf %160, %161 : vector<5x1xf32>
    %163 = vector.broadcast %153 : vector<5x1xf32> to vector<5x32xf32>
    %164 = arith.subf %145, %163 : vector<5x32xf32>
    %cst_70 = arith.constant 9.99999997E-7 : f32
    %165 = vector.broadcast %cst_70 : f32 to vector<5x1xf32>
    %166 = arith.addf %162, %165 : vector<5x1xf32>
    %167 = math.rsqrt %166 : vector<5x1xf32>
    %168 = vector.broadcast %167 : vector<5x1xf32> to vector<5x32xf32>
    %169 = arith.mulf %164, %168 : vector<5x32xf32>
    %170 = vector.broadcast %147 : vector<1x32xf32> to vector<5x32xf32>
    %171 = arith.mulf %169, %170 : vector<5x32xf32>
    %172 = vector.broadcast %149 : vector<1x32xf32> to vector<5x32xf32>
    %173 = arith.addf %171, %172 : vector<5x32xf32>
    %174 = arith.truncf %173 : vector<5x32xf32> to vector<5x32xbf16>
    %c0_71 = arith.constant 0 : index
    %c0_72 = arith.constant 0 : index
    %c0_73 = arith.constant 0 : index
    %175 = vector.load %arg16[%c0_71, %c0_72, %c0_73] : memref<1x32x64xbf16, #tpu.memory_space<vmem>>, vector<1x32x64xbf16>
    %176 = vector.shape_cast %175 : vector<1x32x64xbf16> to vector<32x64xbf16>
    %cst_74 = arith.constant dense<0.000000e+00> : vector<5x64xf32>
    %177 = tpu.matmul %174, %176, %cst_74 {dimension_numbers = #tpu.dot_dimension_numbers<[1], [0], [0], [1], [0, 0, 1, 1], [], []>} : vector<5x32xbf16>, vector<32x64xbf16>, vector<5x64xf32> -> vector<5x64xf32>
    %c0_75 = arith.constant 0 : index
    %c0_76 = arith.constant 0 : index
    %c0_77 = arith.constant 0 : index
    %178 = vector.load %arg17[%c0_75, %c0_76, %c0_77] : memref<1x1x64xf32, #tpu.memory_space<vmem>>, vector<1x1x64xf32>
    %179 = vector.shape_cast %178 : vector<1x1x64xf32> to vector<1x64xf32>
    %180 = vector.broadcast %179 : vector<1x64xf32> to vector<5x64xf32>
    %181 = arith.addf %177, %180 : vector<5x64xf32>
    %182 = arith.mulf %181, %181 : vector<5x64xf32>
    %183 = arith.mulf %181, %182 : vector<5x64xf32>
    %cst_78 = arith.constant 4.471500e-02 : f32
    %184 = vector.broadcast %cst_78 : f32 to vector<5x64xf32>
    %185 = arith.mulf %184, %183 : vector<5x64xf32>
    %186 = arith.addf %181, %185 : vector<5x64xf32>
    %cst_79 = arith.constant 0.797884583 : f32
    %187 = vector.broadcast %cst_79 : f32 to vector<5x64xf32>
    %188 = arith.mulf %187, %186 : vector<5x64xf32>
    %189 = math.tanh %188 : vector<5x64xf32>
    %cst_80 = arith.constant 1.000000e+00 : f32
    %190 = vector.broadcast %cst_80 : f32 to vector<5x64xf32>
    %191 = arith.addf %190, %189 : vector<5x64xf32>
    %cst_81 = arith.constant 5.000000e-01 : f32
    %192 = vector.broadcast %cst_81 : f32 to vector<5x64xf32>
    %193 = arith.mulf %192, %191 : vector<5x64xf32>
    %194 = arith.mulf %181, %193 : vector<5x64xf32>
    %195 = arith.truncf %194 : vector<5x64xf32> to vector<5x64xbf16>
    %c0_82 = arith.constant 0 : index
    %c0_83 = arith.constant 0 : index
    %c0_84 = arith.constant 0 : index
    %196 = vector.load %arg18[%c0_82, %c0_83, %c0_84] : memref<1x64x32xbf16, #tpu.memory_space<vmem>>, vector<1x64x32xbf16>
    %197 = vector.shape_cast %196 : vector<1x64x32xbf16> to vector<64x32xbf16>
    %cst_85 = arith.constant dense<0.000000e+00> : vector<5x32xf32>
    %198 = tpu.matmul %195, %197, %cst_85 {dimension_numbers = #tpu.dot_dimension_numbers<[1], [0], [0], [1], [0, 0, 1, 1], [], []>} : vector<5x64xbf16>, vector<64x32xbf16>, vector<5x32xf32> -> vector<5x32xf32>
    %c0_86 = arith.constant 0 : index
    %c0_87 = arith.constant 0 : index
    %c0_88 = arith.constant 0 : index
    %199 = vector.load %arg19[%c0_86, %c0_87, %c0_88] : memref<1x1x32xf32, #tpu.memory_space<vmem>>, vector<1x1x32xf32>
    %200 = vector.shape_cast %199 : vector<1x1x32xf32> to vector<1x32xf32>
    %201 = vector.broadcast %200 : vector<1x32xf32> to vector<5x32xf32>
    %202 = arith.addf %198, %201 : vector<5x32xf32>
    %203 = arith.addf %145, %202 : vector<5x32xf32>
    %c0_89 = arith.constant 0 : index
    %c0_90 = arith.constant 0 : index
    %c0_91 = arith.constant 0 : index
    %204 = vector.load %arg22[%c0_89, %c0_90, %c0_91] : memref<1x5x32xf32, #tpu.memory_space<vmem>>, vector<1x5x32xf32>
    %205 = vector.shape_cast %204 : vector<1x5x32xf32> to vector<5x32xf32>
    %206 = vector.shape_cast %203 : vector<5x32xf32> to vector<1x5x32xf32>
    tpu.vector_store %arg22[%c0_89, %c0_90, %c0_91], %206 {strides = array<i32>} : memref<1x5x32xf32, #tpu.memory_space<vmem>>, vector<1x5x32xf32>,
    %c1_i32 = arith.constant 1 : i32
    %207 = arith.cmpi eq, %arg1, %c1_i32 : i32
    %208 = arith.extui %207 : i1 to i32
    %c0_i32_92 = arith.constant 0 : i32
    %209 = arith.cmpi ne, %208, %c0_i32_92 : i32
    scf.if %209 {
      %c0_93 = arith.constant 0 : index
      %c0_94 = arith.constant 0 : index
      %210 = vector.load %arg20[%c0_93, %c0_94] : memref<1x32xf32, #tpu.memory_space<vmem>>, vector<1x32xf32>
      %c0_95 = arith.constant 0 : index
      %c0_96 = arith.constant 0 : index
      %211 = vector.load %arg21[%c0_95, %c0_96] : memref<1x32xf32, #tpu.memory_space<vmem>>, vector<1x32xf32>
      %cst_97 = arith.constant dense<0.000000e+00> : vector<5xf32>
      %212 = vector.multi_reduction <add>, %203, %cst_97 [1] : vector<5x32xf32> to vector<5xf32>
      %213 = vector.shape_cast %212 : vector<5xf32> to vector<5x1xf32>
      %cst_98 = arith.constant 3.200000e+01 : f32
      %214 = vector.broadcast %cst_98 : f32 to vector<5x1xf32>
      %215 = arith.divf %213, %214 : vector<5x1xf32>
      %216 = vector.broadcast %215 : vector<5x1xf32> to vector<5x32xf32>
      %217 = arith.subf %203, %216 : vector<5x32xf32>
      %218 = vector.broadcast %215 : vector<5x1xf32> to vector<5x32xf32>
      %219 = arith.subf %203, %218 : vector<5x32xf32>
      %220 = arith.mulf %217, %219 : vector<5x32xf32>
      %cst_99 = arith.constant dense<0.000000e+00> : vector<5xf32>
      %221 = vector.multi_reduction <add>, %220, %cst_99 [1] : vector<5x32xf32> to vector<5xf32>
      %222 = vector.shape_cast %221 : vector<5xf32> to vector<5x1xf32>
      %cst_100 = arith.constant 3.200000e+01 : f32
      %223 = vector.broadcast %cst_100 : f32 to vector<5x1xf32>
      %224 = arith.divf %222, %223 : vector<5x1xf32>
      %225 = vector.broadcast %215 : vector<5x1xf32> to vector<5x32xf32>
      %226 = arith.subf %203, %225 : vector<5x32xf32>
      %cst_101 = arith.constant 9.99999997E-7 : f32
      %227 = vector.broadcast %cst_101 : f32 to vector<5x1xf32>
      %228 = arith.addf %224, %227 : vector<5x1xf32>
      %229 = math.rsqrt %228 : vector<5x1xf32>
      %230 = vector.broadcast %229 : vector<5x1xf32> to vector<5x32xf32>
      %231 = arith.mulf %226, %230 : vector<5x32xf32>
      %232 = vector.broadcast %210 : vector<1x32xf32> to vector<5x32xf32>
      %233 = arith.mulf %231, %232 : vector<5x32xf32>
      %234 = vector.broadcast %211 : vector<1x32xf32> to vector<5x32xf32>
      %235 = arith.addf %233, %234 : vector<5x32xf32>
      %c0_102 = arith.constant 0 : index
      %c0_103 = arith.constant 0 : index
      %c0_104 = arith.constant 0 : index
      %236 = vector.load %arg22[%c0_102, %c0_103, %c0_104] : memref<1x5x32xf32, #tpu.memory_space<vmem>>, vector<1x5x32xf32>
      %237 = vector.shape_cast %236 : vector<1x5x32xf32> to vector<5x32xf32>
      %238 = vector.shape_cast %235 : vector<5x32xf32> to vector<1x5x32xf32>
      tpu.vector_store %arg22[%c0_102, %c0_103, %c0_104], %238 {strides = array<i32>} : memref<1x5x32xf32, #tpu.memory_space<vmem>>, vector<1x5x32xf32>,
    } else {
    }
    return
  }
  func.func @transform_0(%arg0: i32, %arg1: i32) -> (i32, i32, i32) {
    %c0_i32 = arith.constant 0 : i32
    %c0_i32_0 = arith.constant 0 : i32
    %c0_i32_1 = arith.constant 0 : i32
    return %arg0, %c0_i32, %c0_i32_0 : i32, i32, i32
  }
  func.func @transform_1(%arg0: i32, %arg1: i32) -> (i32, i32, i32) {
    %c0_i32 = arith.constant 0 : i32
    %c0_i32_0 = arith.constant 0 : i32
    %c0_i32_1 = arith.constant 0 : i32
    return %arg0, %c0_i32, %c0_i32_0 : i32, i32, i32
  }
  func.func @transform_2(%arg0: i32, %arg1: i32) -> (i32, i32, i32) {
    %c0_i32 = arith.constant 0 : i32
    %c0_i32_0 = arith.constant 0 : i32
    %c0_i32_1 = arith.constant 0 : i32
    return %arg1, %c0_i32, %c0_i32_0 : i32, i32, i32
  }
  func.func @transform_3(%arg0: i32, %arg1: i32) -> (i32, i32, i32) {
    %c0_i32 = arith.constant 0 : i32
    %c0_i32_0 = arith.constant 0 : i32
    %c0_i32_1 = arith.constant 0 : i32
    return %arg1, %c0_i32, %c0_i32_0 : i32, i32, i32
  }
  func.func @transform_4(%arg0: i32, %arg1: i32) -> (i32, i32, i32) {
    %c0_i32 = arith.constant 0 : i32
    %c0_i32_0 = arith.constant 0 : i32
    %c0_i32_1 = arith.constant 0 : i32
    return %arg1, %c0_i32, %c0_i32_0 : i32, i32, i32
  }
  func.func @transform_5(%arg0: i32, %arg1: i32) -> (i32, i32, i32) {
    %c0_i32 = arith.constant 0 : i32
    %c0_i32_0 = arith.constant 0 : i32
    %c0_i32_1 = arith.constant 0 : i32
    return %arg1, %c0_i32, %c0_i32_0 : i32, i32, i32
  }
  func.func @transform_6(%arg0: i32, %arg1: i32) -> (i32, i32, i32) {
    %c0_i32 = arith.constant 0 : i32
    %c0_i32_0 = arith.constant 0 : i32
    %c0_i32_1 = arith.constant 0 : i32
    return %arg1, %c0_i32, %c0_i32_0 : i32, i32, i32
  }
  func.func @transform_7(%arg0: i32, %arg1: i32) -> (i32, i32, i32) {
    %c0_i32 = arith.constant 0 : i32
    %c0_i32_0 = arith.constant 0 : i32
    %c0_i32_1 = arith.constant 0 : i32
    return %arg1, %c0_i32, %c0_i32_0 : i32, i32, i32
  }
  func.func @transform_8(%arg0: i32, %arg1: i32) -> (i32, i32, i32) {
    %c0_i32 = arith.constant 0 : i32
    %c0_i32_0 = arith.constant 0 : i32
    %c0_i32_1 = arith.constant 0 : i32
    return %arg1, %c0_i32, %c0_i32_0 : i32, i32, i32
  }
  func.func @transform_9(%arg0: i32, %arg1: i32) -> (i32, i32, i32) {
    %c0_i32 = arith.constant 0 : i32
    %c0_i32_0 = arith.constant 0 : i32
    %c0_i32_1 = arith.constant 0 : i32
    return %arg1, %c0_i32, %c0_i32_0 : i32, i32, i32
  }
  func.func @transform_10(%arg0: i32, %arg1: i32) -> (i32, i32, i32) {
    %c0_i32 = arith.constant 0 : i32
    %c0_i32_0 = arith.constant 0 : i32
    %c0_i32_1 = arith.constant 0 : i32
    return %arg1, %c0_i32, %c0_i32_0 : i32, i32, i32
  }
  func.func @transform_11(%arg0: i32, %arg1: i32) -> (i32, i32, i32) {
    %c0_i32 = arith.constant 0 : i32
    %c0_i32_0 = arith.constant 0 : i32
    %c0_i32_1 = arith.constant 0 : i32
    return %arg1, %c0_i32, %c0_i32_0 : i32, i32, i32
  }
  func.func @transform_12(%arg0: i32, %arg1: i32) -> (i32, i32, i32) {
    %c0_i32 = arith.constant 0 : i32
    %c0_i32_0 = arith.constant 0 : i32
    %c0_i32_1 = arith.constant 0 : i32
    return %arg1, %c0_i32, %c0_i32_0 : i32, i32, i32
  }
  func.func @transform_13(%arg0: i32, %arg1: i32) -> (i32, i32, i32) {
    %c0_i32 = arith.constant 0 : i32
    %c0_i32_0 = arith.constant 0 : i32
    %c0_i32_1 = arith.constant 0 : i32
    return %arg1, %c0_i32, %c0_i32_0 : i32, i32, i32
  }
  func.func @transform_14(%arg0: i32, %arg1: i32) -> (i32, i32, i32) {
    %c0_i32 = arith.constant 0 : i32
    %c0_i32_0 = arith.constant 0 : i32
    %c0_i32_1 = arith.constant 0 : i32
    return %arg1, %c0_i32, %c0_i32_0 : i32, i32, i32
  }
  func.func @transform_15(%arg0: i32, %arg1: i32) -> (i32, i32, i32) {
    %c0_i32 = arith.constant 0 : i32
    %c0_i32_0 = arith.constant 0 : i32
    %c0_i32_1 = arith.constant 0 : i32
    return %arg1, %c0_i32, %c0_i32_0 : i32, i32, i32
  }
  func.func @transform_16(%arg0: i32, %arg1: i32) -> (i32, i32, i32) {
    %c0_i32 = arith.constant 0 : i32
    %c0_i32_0 = arith.constant 0 : i32
    %c0_i32_1 = arith.constant 0 : i32
    return %arg1, %c0_i32, %c0_i32_0 : i32, i32, i32
  }
  func.func @transform_17(%arg0: i32, %arg1: i32) -> (i32, i32, i32) {
    %c0_i32 = arith.constant 0 : i32
    %c0_i32_0 = arith.constant 0 : i32
    %c0_i32_1 = arith.constant 0 : i32
    return %arg1, %c0_i32, %c0_i32_0 : i32, i32, i32
  }
  func.func @transform_18(%arg0: i32, %arg1: i32) -> (i32, i32) {
    %c0_i32 = arith.constant 0 : i32
    %c0_i32_0 = arith.constant 0 : i32
    %c0_i32_1 = arith.constant 0 : i32
    return %c0_i32, %c0_i32_0 : i32, i32
  }
  func.func @transform_19(%arg0: i32, %arg1: i32) -> (i32, i32) {
    %c0_i32 = arith.constant 0 : i32
    %c0_i32_0 = arith.constant 0 : i32
    %c0_i32_1 = arith.constant 0 : i32
    return %c0_i32, %c0_i32_0 : i32, i32
  }
  func.func @transform_20(%arg0: i32, %arg1: i32) -> (i32, i32, i32) {
    %c0_i32 = arith.constant 0 : i32
    %c0_i32_0 = arith.constant 0 : i32
    %c0_i32_1 = arith.constant 0 : i32
    return %arg0, %c0_i32, %c0_i32_0 : i32, i32, i32
  }
}

</mosaic_0001>

<llo_original>
// kernel: _lambda_.3
$region0: #{_lambda_.3}
  #allocation0 [shape = 'u32[]', space=smem, size = 0x4, offset = 0x4, fixed_abs, tag = 'smem constant byte address 0x4 - core index']
  #allocation1 [shape = 'u32[72,128]{1,0:T(1,128)}', space=vmem, size = 0x9000, scoped, tag = 'internal scratch']
  #allocation2 [shape = 'f32[1,1]{1,0:T(1,128)S(1)}', space=vmem, size = 0x200, scoped, tag = 'scoped memory for _lambda_.3']
  #allocation3 [shape = 'f32[1,1]{1,0:T(1,128)S(1)}', space=vmem, size = 0x200, scoped, tag = 'scoped memory for _lambda_.3']
  #allocation4 [shape = 'f32[1,1]{1,0:T(1,128)S(1)}', space=vmem, size = 0x200, scoped, tag = 'scoped memory for _lambda_.3']
  %s0 = inlined_call_operand.vmem [shape: f32[2,5,32], index: 0, kind: input, shape index: {}]
  %s1 = inlined_call_operand.vmem [shape: f32[64,64], index: 1, kind: input, shape index: {}]
  %s2 = inlined_call_operand.vmem [shape: f32[1,64], index: 2, kind: input, shape index: {}]
  %s3 = inlined_call_operand.vmem [shape: f32[64,16], index: 3, kind: input, shape index: {}]
  %s4 = inlined_call_operand.vmem [shape: f32[1,16], index: 4, kind: input, shape index: {}]
  %s5 = inlined_call_operand.vmem [shape: f32[16,1], index: 5, kind: input, shape index: {}]
  %s6 = inlined_call_operand.<no memory space> [shape: f32[1,1], index: 6, kind: input, shape index: {}]
  %s7 = inlined_call_operand.<no memory space> [shape: f32[1,1], index: 7, kind: input, shape index: {}]
  %s8 = inlined_call_operand.<no memory space> [shape: f32[1,1], index: 8, kind: input, shape index: {}]
  %s9 = inlined_call_operand.vmem [shape: f32[2,1], index: 9, kind: output, shape index: {}]
  %s10 = sld [smem:[#allocation0]]
  $region46: #{_lambda_.3} parent=0
    _
  %s12 = ssub.s32 1, %s10
  %s13 = scalar_select 0, %s12, %s10
  %v14 = vstv %s6
  %15 = vst [vmem:[#allocation2] sm:$0x1] %v14
  %v16 = vstv %s7
  %17 = vst [vmem:[#allocation3] sm:$0x1] %v16
  %v18 = vstv %s8
  %19 = vst [vmem:[#allocation4] sm:$0x1] %v18
  // Predicated region
  $region2: #{_lambda_.3} parent=0 // pred_check
    _
  $region3: #{_lambda_.3} parent=0 // pred_check_branch
    %21 = sbr.rel (0) target = $region5
  $region4: #{_lambda_.3} parent=0 // pred_region
    _
  $region5: #{_lambda_.3} parent=0 // pred_fallthru
    _
  // Predicated region
  $region6: #{_lambda_.3} parent=0 // pred_check
    _
  $region7: #{_lambda_.3} parent=0 // pred_check_branch
    %23 = sbr.rel (0) target = $region9
  $region8: #{_lambda_.3} parent=0 // pred_region
    _
  $region9: #{_lambda_.3} parent=0 // pred_fallthru
    _
  // Predicated region
  $region10: #{_lambda_.3} parent=0 // pred_check
    _
  $region11: #{_lambda_.3} parent=0 // pred_check_branch
    %25 = sbr.rel (0) target = $region13
  $region12: #{_lambda_.3} parent=0 // pred_region
    _
  $region13: #{_lambda_.3} parent=0 // pred_fallthru
    _
  // Predicated region
  $region14: #{_lambda_.3} parent=0 // pred_check
    _
  $region15: #{_lambda_.3} parent=0 // pred_check_branch
    %27 = sbr.rel (0) target = $region17
  $region16: #{_lambda_.3} parent=0 // pred_region
    _
  $region17: #{_lambda_.3} parent=0 // pred_fallthru
    _
  // Predicated region
  $region18: #{_lambda_.3} parent=0 // pred_check
    _
  $region19: #{_lambda_.3} parent=0 // pred_check_branch
    %29 = sbr.rel (0) target = $region21
  $region20: #{_lambda_.3} parent=0 // pred_region
    _
  $region21: #{_lambda_.3} parent=0 // pred_fallthru
    _
  // Predicated region
  $region22: #{_lambda_.3} parent=0 // pred_check
    _
  $region23: #{_lambda_.3} parent=0 // pred_check_branch
    %31 = sbr.rel (0) target = $region25
  $region24: #{_lambda_.3} parent=0 // pred_region
    _
  $region25: #{_lambda_.3} parent=0 // pred_fallthru
    _
  // Predicated region
  $region26: #{_lambda_.3} parent=0 // pred_check
    _
  $region27: #{_lambda_.3} parent=0 // pred_check_branch
    %33 = sbr.rel (0) target = $region29
  $region28: #{_lambda_.3} parent=0 // pred_region
    _
  $region29: #{_lambda_.3} parent=0 // pred_fallthru
    _
  // Predicated region
  $region30: #{_lambda_.3} parent=0 // pred_check
    _
  $region31: #{_lambda_.3} parent=0 // pred_check_branch
    %35 = sbr.rel (0) target = $region33
  $region32: #{_lambda_.3} parent=0 // pred_region
    _
  $region33: #{_lambda_.3} parent=0 // pred_fallthru
    _
  // Predicated region
  $region34: #{_lambda_.3} parent=0 // pred_check
    _
  $region35: #{_lambda_.3} parent=0 // pred_check_branch
    %37 = sbr.rel (0) target = $region37
  $region36: #{_lambda_.3} parent=0 // pred_region
    _
  $region37: #{_lambda_.3} parent=0 // pred_fallthru
    _
  %v38 = vld [vmem:[%s0] sm:$0x1f]
  %v39 = vld [vmem:[%s0 + $0x8] sm:$0x1f]
  %v42 = vrot.slane %v38, 1
  %v43 = vrot.slane %v39, 1
  %vm46 = vcmask 257024
  %v47 = vsel %vm46, %v42, 0.0
  %v48 = vrot.slane %v47, 4
  %v49 = vadd.f32 %v47, %v48
  %v50 = vrot.slane %v49, 2
  %v51 = vadd.f32 %v49, %v50
  %v52 = vrot.slane %v51, 1
  %v53 = vadd.f32 %v51, %v52
  %v54 = vsel %vm46, %v43, 0.0
  %v55 = vrot.slane %v54, 4
  %v56 = vadd.f32 %v54, %v55
  %v57 = vrot.slane %v56, 2
  %v58 = vadd.f32 %v56, %v57
  %v59 = vrot.slane %v58, 1
  %v60 = vadd.f32 %v58, %v59
  %v61 = vrcp.pop 4.0
  %v62 = vmul.f32 4.0, %v61
  %v63 = vsub.f32 1.0, %v62
  %v64 = vmul.f32 %v61, %v63
  %v65 = vadd.f32 %v61, %v64
  %vm66 = vweird.f32 %v61
  %v67 = vsel %vm66, %v61, %v65
  %v68 = vmul.f32 %v53, %v67
  %v69 = vmul.f32 %v60, %v67
  %v70 = vld [vmem:[%s1] sm:$0xff]
  %v71 = vld [vmem:[%s1 + $0x8] sm:$0xff]
  %v72 = vld [vmem:[%s1 + $0x10] sm:$0xff]
  %v73 = vld [vmem:[%s1 + $0x18] sm:$0xff]
  %v74 = vld [vmem:[%s1 + $0x20] sm:$0xff]
  %v75 = vld [vmem:[%s1 + $0x28] sm:$0xff]
  %v76 = vld [vmem:[%s1 + $0x30] sm:$0xff]
  %v77 = vld [vmem:[%s1 + $0x38] sm:$0xff]
  %vm80 = vcmask 1041409
  %v81 = vsel %vm80, %v69, %v68
  %vm82 = vcmask 261120
  %v83 = vsel %vm82, %v81, 0
  %85 = vmatpush.msra.mxu0 0.0
  %86 = vmatpush.msra.mxu0 0.0
  %87 = vmatpush.msra.mxu0 0.0
  %88 = vmatpush.msra.mxu0 0.0
  %89 = vmatpush.msra.mxu0 0.0
  %90 = vmatpush.msra.mxu0 0.0
  %91 = vmatpush.msra.mxu0 0.0
  %92 = vmatpush.msra.mxu0 0.0
  %93 = vmatpush.msra.mxu0 0.0
  %94 = vmatpush.msra.mxu0 0.0
  %95 = vmatpush.msra.mxu0 0.0
  %96 = vmatpush.msra.mxu0 0.0
  %97 = vmatpush.msra.mxu0 %v77
  %98 = vmatpush.msra.mxu0 %v76
  %99 = vmatpush.msra.mxu0 %v75
  %100 = vmatpush.msra.mxu0 %v74
  %101 = vmatmul.f32.gmra.mxu0 %v83
  %v102 = vpop.f32.mrf.mxu0
  %v103 = vadd.f32 0.0, %v102
  %104 = vdwg.mxu0
  %v105 = vrot.slane %v39, 7
  %v106 = vsel %vm80, %v105, %v38
  %v107 = vsel %vm82, %v106, 0
  %109 = vmatpush.msra.mxu0 0.0
  %110 = vmatpush.msra.mxu0 0.0
  %111 = vmatpush.msra.mxu0 0.0
  %112 = vmatpush.msra.mxu0 0.0
  %113 = vmatpush.msra.mxu0 0.0
  %114 = vmatpush.msra.mxu0 0.0
  %115 = vmatpush.msra.mxu0 0.0
  %116 = vmatpush.msra.mxu0 0.0
  %117 = vmatpush.msra.mxu0 0.0
  %118 = vmatpush.msra.mxu0 0.0
  %119 = vmatpush.msra.mxu0 0.0
  %120 = vmatpush.msra.mxu0 0.0
  %121 = vmatpush.msra.mxu0 %v73
  %122 = vmatpush.msra.mxu0 %v72
  %123 = vmatpush.msra.mxu0 %v71
  %124 = vmatpush.msra.mxu0 %v70
  %125 = vmatmul.f32.gmra.mxu0 %v107
  %v126 = vpop.f32.mrf.mxu0
  %v127 = vadd.f32 %v103, %v126
  %128 = vdwg.mxu0
  %v129 = vld [vmem:[%s2] sm:$0x1]
  %v131 = vperm.slane %v129, 0
  %v133 = vadd.f32 %v127, %v131
  %v134 = vmax.f32 %v133, 0.0
  %v135 = vld [vmem:[%s3] sm:$0xff]
  %v136 = vld [vmem:[%s3 + $0x8] sm:$0xff]
  %v137 = vld [vmem:[%s3 + $0x10] sm:$0xff]
  %v138 = vld [vmem:[%s3 + $0x18] sm:$0xff]
  %v139 = vld [vmem:[%s3 + $0x20] sm:$0xff]
  %v140 = vld [vmem:[%s3 + $0x28] sm:$0xff]
  %v141 = vld [vmem:[%s3 + $0x30] sm:$0xff]
  %v142 = vld [vmem:[%s3 + $0x38] sm:$0xff]
  %v143 = vld [vmem:[%s4] sm:$0x1]
  %v145 = vperm.slane %v143, 0
  %vm147 = vcmask 523264
  %v149 = vsel %vm147, %v134, 0
  %151 = vmatpush.msra.mxu0 0.0
  %152 = vmatpush.msra.mxu0 0.0
  %153 = vmatpush.msra.mxu0 0.0
  %154 = vmatpush.msra.mxu0 0.0
  %155 = vmatpush.msra.mxu0 0.0
  %156 = vmatpush.msra.mxu0 0.0
  %157 = vmatpush.msra.mxu0 0.0
  %158 = vmatpush.msra.mxu0 0.0
  %159 = vmatpush.msra.mxu0 %v142
  %160 = vmatpush.msra.mxu0 %v141
  %161 = vmatpush.msra.mxu0 %v140
  %162 = vmatpush.msra.mxu0 %v139
  %163 = vmatpush.msra.mxu0 %v138
  %164 = vmatpush.msra.mxu0 %v137
  %165 = vmatpush.msra.mxu0 %v136
  %166 = vmatpush.msra.mxu0 %v135
  %167 = vmatmul.f32.gmra.mxu0 %v149
  %v168 = vpop.f32.mrf.mxu0
  %v169 = vadd.f32 %v145, %v168
  %170 = vdwg.mxu0
  %v171 = vmax.f32 %v169, 0.0
  %v172 = vld [vmem:[%s5] sm:$0xff]
  %v173 = vld [vmem:[%s5 + $0x8] sm:$0xff]
  %v174 = vld [vmem:[#allocation2] sm:$0x1]
  %v176 = vperm.slane %v174, 0
  %vm178 = vcmask 130048
  %v180 = vsel %vm178, %v171, 0
  %182 = vmatpush.msra.mxu0 0.0
  %183 = vmatpush.msra.mxu0 0.0
  %184 = vmatpush.msra.mxu0 0.0
  %185 = vmatpush.msra.mxu0 0.0
  %186 = vmatpush.msra.mxu0 0.0
  %187 = vmatpush.msra.mxu0 0.0
  %188 = vmatpush.msra.mxu0 0.0
  %189 = vmatpush.msra.mxu0 0.0
  %190 = vmatpush.msra.mxu0 0.0
  %191 = vmatpush.msra.mxu0 0.0
  %192 = vmatpush.msra.mxu0 0.0
  %193 = vmatpush.msra.mxu0 0.0
  %194 = vmatpush.msra.mxu0 0.0
  %195 = vmatpush.msra.mxu0 0.0
  %196 = vmatpush.msra.mxu0 %v173
  %197 = vmatpush.msra.mxu0 %v172
  %198 = vmatmul.f32.gmra.mxu0 %v180
  %v199 = vpop.f32.mrf.mxu0
  %v200 = vadd.f32 %v176, %v199
  %201 = vdwg.mxu0
  %v202 = vxor.u32 %v200, 2147483648
  %v203 = vmul.f32 %v202, 1.442695
  %v204 = vpow.pop %v203
  %v205 = vadd.f32 %v204, 1.0
  %v206 = vrcp.pop %v205
  %v207 = vmul.f32 %v205, %v206
  %v208 = vsub.f32 1.0, %v207
  %v209 = vmul.f32 %v206, %v208
  %v210 = vadd.f32 %v206, %v209
  %vm211 = vweird.f32 %v205
  %vm212 = vweird.f32 %v206
  %vm213 = vmor %vm211, %vm212
  %v214 = vsel %vm213, %v206, %v210
  %v215 = vand.u32 2147483647, %v205
  %vm216 = vcmp.eq.f32.partialorder %v215, 8.507059e+37
  %v217 = vand.u32 %v205, 2147483648
  %v218 = vor.u32 1.1754944e-38, %v217
  %v219 = vsel %vm216, %v218, %v214
  %v220 = vmul.f32 1.0, %v219
  %v221 = vld [vmem:[#allocation3] sm:$0x1]
  %v223 = vperm.slane %v221, 0
  %v225 = vmul.f32 %v220, %v223
  %v226 = vld [vmem:[#allocation4] sm:$0x1]
  %v228 = vperm.slane %v226, 0
  %v230 = vadd.f32 %v225, %v228
  %vm231 = vcmask 1024
  %232 = vst.msk [vmem:[%s9] sm:$0x3] %vm231, %v230
  // Predicated region
  $region38: #{_lambda_.3} parent=0 // pred_check
    _
  $region39: #{_lambda_.3} parent=0 // pred_check_branch
    %234 = sbr.rel (0) target = $region41
  $region40: #{_lambda_.3} parent=0 // pred_region
    _
  $region41: #{_lambda_.3} parent=0 // pred_fallthru
    _
  // Predicated region
  $region42: #{_lambda_.3} parent=0 // pred_check
    _
  $region43: #{_lambda_.3} parent=0 // pred_check_branch
    %236 = sbr.rel (0) target = $region45
  $region44: #{_lambda_.3} parent=0 // pred_region
    _
  $region45: #{_lambda_.3} parent=0 // pred_fallthru
    _

// kernel: _lambda_.2
$region0: #{_lambda_.2}
  #allocation0 [shape = 'u32[]', space=smem, size = 0x4, offset = 0x4, fixed_abs, tag = 'smem constant byte address 0x4 - core index']
  #allocation1 [shape = 'u32[72,128]{1,0:T(1,128)}', space=vmem, size = 0x9000, scoped, tag = 'internal scratch']
  #allocation2 [shape = 'f32[5,32]{1,0:T(8,128)}', space=vmem, size = 0x1000, scoped, tag = 'scratch operand']
  %s0 = inlined_call_operand.vmem [shape: f32[2,5,32], index: 0, kind: input, shape index: {}]
  %s1 = inlined_call_operand.vmem [shape: f32[2,2,32], index: 1, kind: input, shape index: {}]
  %s2 = inlined_call_operand.vmem [shape: f32[2,1,32], index: 2, kind: input, shape index: {}]
  %s3 = inlined_call_operand.vmem [shape: f32[2,1,32], index: 3, kind: input, shape index: {}]
  %s4 = inlined_call_operand.vmem [shape: f32[2,1,32], index: 4, kind: input, shape index: {}]
  %s5 = inlined_call_operand.vmem [shape: f32[2,1,32], index: 5, kind: input, shape index: {}]
  %s6 = inlined_call_operand.vmem [shape: bf16[2,32,32], index: 6, kind: input, shape index: {}]
  %s7 = inlined_call_operand.vmem [shape: f32[2,1,32], index: 7, kind: input, shape index: {}]
  %s8 = inlined_call_operand.vmem [shape: bf16[2,32,64], index: 8, kind: input, shape index: {}]
  %s9 = inlined_call_operand.vmem [shape: f32[2,1,64], index: 9, kind: input, shape index: {}]
  %s10 = inlined_call_operand.vmem [shape: bf16[2,32,32], index: 10, kind: input, shape index: {}]
  %s11 = inlined_call_operand.vmem [shape: f32[2,1,32], index: 11, kind: input, shape index: {}]
  %s12 = inlined_call_operand.vmem [shape: f32[2,1,32], index: 12, kind: input, shape index: {}]
  %s13 = inlined_call_operand.vmem [shape: f32[2,1,32], index: 13, kind: input, shape index: {}]
  %s14 = inlined_call_operand.vmem [shape: bf16[2,32,64], index: 14, kind: input, shape index: {}]
  %s15 = inlined_call_operand.vmem [shape: f32[2,1,64], index: 15, kind: input, shape index: {}]
  %s16 = inlined_call_operand.vmem [shape: bf16[2,64,32], index: 16, kind: input, shape index: {}]
  %s17 = inlined_call_operand.vmem [shape: f32[2,1,32], index: 17, kind: input, shape index: {}]
  %s18 = inlined_call_operand.vmem [shape: f32[1,32], index: 18, kind: input, shape index: {}]
  %s19 = inlined_call_operand.vmem [shape: f32[1,32], index: 19, kind: input, shape index: {}]
  %s20 = inlined_call_operand.vmem [shape: f32[2,5,32], index: 20, kind: output, shape index: {}]
  %s21 = sld [smem:[#allocation0]]
  $region121: #{_lambda_.2} parent=0
    _
  %s23 = ssub.s32 1, %s21
  %s24 = scalar_select 0, %s23, %s21
  loop: start=0, step=1, limit=6
  $region2: #{_lambda_.2} parent=0 // loop_pre_header
    _
  $region3: #{_lambda_.2} parent=0 // loop_header
    %s26 = sphi 0, %s30
    %p27 = scmp.ge.s32.totalorder %s26, 6
    %s33 = sphi 0, %s45
    %s34 = sphi 0, %s41
    %s35 = sphi 0, %s33
    %s36 = sphi 0, %s34
    %s37 = sphi 0, %s35
    %s38 = sphi 0, %s36
    %s48 = sphi 0, %s50
    %s51 = sphi 0, %s48
    %s52 = sphi 0, %s51
    %s68 = sphi 0, %s52
    %s74 = sphi 0, %s76
    %s77 = sphi 0, %s74
    %s78 = sphi 0, %s77
    %s94 = sphi 0, %s78
    %s100 = sphi 0, %s102
    %s103 = sphi 0, %s100
    %s104 = sphi 0, %s103
    %s120 = sphi 0, %s104
    %s126 = sphi 0, %s128
    %s129 = sphi 0, %s126
    %s130 = sphi 0, %s129
    %s146 = sphi 0, %s130
    %s152 = sphi 0, %s154
    %s155 = sphi 0, %s152
    %s156 = sphi 0, %s155
    %s172 = sphi 0, %s156
    %s178 = sphi 0, %s180
    %s181 = sphi 0, %s178
    %s182 = sphi 0, %s181
    %s198 = sphi 0, %s182
    %s204 = sphi 0, %s206
    %s207 = sphi 0, %s204
    %s208 = sphi 0, %s207
    %s224 = sphi 0, %s208
    %s230 = sphi 0, %s232
    %s233 = sphi 0, %s230
    %s234 = sphi 0, %s233
    %s250 = sphi 0, %s234
    %s256 = sphi 0, %s258
    %s259 = sphi 0, %s256
    %s260 = sphi 0, %s259
    %s276 = sphi 0, %s260
    %s282 = sphi 0, %s284
    %s285 = sphi 0, %s282
    %s286 = sphi 0, %s285
    %s302 = sphi 0, %s286
    %s308 = sphi 0, %s310
    %s311 = sphi 0, %s308
    %s312 = sphi 0, %s311
    %s328 = sphi 0, %s312
    %s334 = sphi 0, %s336
    %s337 = sphi 0, %s334
    %s338 = sphi 0, %s337
    %s354 = sphi 0, %s338
    %s360 = sphi 0, %s362
    %s363 = sphi 0, %s360
    %s364 = sphi 0, %s363
    %s380 = sphi 0, %s364
    %s386 = sphi 0, %s388
    %s389 = sphi 0, %s386
    %s390 = sphi 0, %s389
    %s406 = sphi 0, %s390
    %s412 = sphi 0, %s414
    %s415 = sphi 0, %s412
    %s416 = sphi 0, %s415
    %s432 = sphi 0, %s416
    %s438 = sphi 0, %s440
    %s441 = sphi 0, %s438
    %s442 = sphi 0, %s441
    %s458 = sphi 0, %s442
    %s464 = sphi 0, %s466
    %s467 = sphi 0, %s464
    %s468 = sphi 0, %s467
    %s484 = sphi 0, %s468
    %s490 = sphi 0, %s492
    %s493 = sphi 0, %s490
    %s494 = sphi 0, %s493
    %s510 = sphi 0, %s494
    %s514 = sphi 0, %s514
    %s516 = sphi 0, %s514
    %s517 = sphi 0, %s516
    %s531 = sphi 0, %s517
    %s535 = sphi 0, %s535
    %s537 = sphi 0, %s535
    %s538 = sphi 0, %s537
    %s552 = sphi 0, %s538
    %s558 = sphi 0, %s560
    %s561 = sphi 0, %s558
    %s562 = sphi 0, %s561
    %s578 = sphi 0, %s562
  $region4: #{_lambda_.2} parent=0 // loop_header_branch
    %29 = sbr.rel (%p27) target = $region8
  $region5: #{_lambda_.2} parent=0 // loop_body
    %s31 = ssub.s32 %s26, 1
    %s32 = ssub.s32 %s26, 2
    %s39 = sadd.s32 1, %s34
    %p40 = scmp.ge.s32.totalorder %s39, 2
    %s41 = scalar_select %p40, 0, %s39
    %s42 = sadd.s32 1, %s33
    %s43 = scalar_select %p40, %s42, %s33
    %p44 = scmp.ge.s32.totalorder %s43, 2
    %s45 = scalar_select %p44, 0, %s43
    %s46 = ssub.s32 %s33, %s45
    %p47 = scmp.eq.s32.totalorder %s46, 0
    %s49 = sadd.s32 %s48, 1
    %s50 = scalar_select %p47, %s48, %s49
    %p53 = pneg %p47
    %p54 = scmp.eq.s32.totalorder %s26, 3
    %p55 = por %p53, %p54
    %p56 = scmp.ne.s32.totalorder %s48, %s51
    %p57 = scmp.eq.s32.totalorder %s26, 0
    %p58 = por %p56, %p57
    %p59 = scmp.ne.s32.totalorder %s48, %s51
    %p60 = scmp.eq.s32.totalorder %s31, 3
    %p61 = por %p59, %p60
    %p62 = scmp.ne.s32.totalorder %s51, %s52
    %p63 = scmp.eq.s32.totalorder %s31, 0
    %p64 = por %p62, %p63
    %p65 = scmp.ne.s32.totalorder %s51, %s52
    %p66 = scmp.eq.s32.totalorder %s32, 3
    %p67 = por %p65, %p66
    %p69 = scmp.ne.s32.totalorder %s52, %s68
    %p70 = scmp.eq.s32.totalorder %s32, 0
    %p71 = por %p69, %p70
    %s72 = ssub.s32 %s33, %s45
    %p73 = scmp.eq.s32.totalorder %s72, 0
    %s75 = sadd.s32 %s74, 1
    %s76 = scalar_select %p73, %s74, %s75
    %p79 = pneg %p73
    %p80 = scmp.eq.s32.totalorder %s26, 3
    %p81 = por %p79, %p80
    %p82 = scmp.ne.s32.totalorder %s74, %s77
    %p83 = scmp.eq.s32.totalorder %s26, 0
    %p84 = por %p82, %p83
    %p85 = scmp.ne.s32.totalorder %s74, %s77
    %p86 = scmp.eq.s32.totalorder %s31, 3
    %p87 = por %p85, %p86
    %p88 = scmp.ne.s32.totalorder %s77, %s78
    %p89 = scmp.eq.s32.totalorder %s31, 0
    %p90 = por %p88, %p89
    %p91 = scmp.ne.s32.totalorder %s77, %s78
    %p92 = scmp.eq.s32.totalorder %s32, 3
    %p93 = por %p91, %p92
    %p95 = scmp.ne.s32.totalorder %s78, %s94
    %p96 = scmp.eq.s32.totalorder %s32, 0
    %p97 = por %p95, %p96
    %s98 = ssub.s32 %s34, %s41
    %p99 = scmp.eq.s32.totalorder %s98, 0
    %s101 = sadd.s32 %s100, 1
    %s102 = scalar_select %p99, %s100, %s101
    %p105 = pneg %p99
    %p106 = scmp.eq.s32.totalorder %s26, 3
    %p107 = por %p105, %p106
    %p108 = scmp.ne.s32.totalorder %s100, %s103
    %p109 = scmp.eq.s32.totalorder %s26, 0
    %p110 = por %p108, %p109
    %p111 = scmp.ne.s32.totalorder %s100, %s103
    %p112 = scmp.eq.s32.totalorder %s31, 3
    %p113 = por %p111, %p112
    %p114 = scmp.ne.s32.totalorder %s103, %s104
    %p115 = scmp.eq.s32.totalorder %s31, 0
    %p116 = por %p114, %p115
    %p117 = scmp.ne.s32.totalorder %s103, %s104
    %p118 = scmp.eq.s32.totalorder %s32, 3
    %p119 = por %p117, %p118
    %p121 = scmp.ne.s32.totalorder %s104, %s120
    %p122 = scmp.eq.s32.totalorder %s32, 0
    %p123 = por %p121, %p122
    %s124 = ssub.s32 %s34, %s41
    %p125 = scmp.eq.s32.totalorder %s124, 0
    %s127 = sadd.s32 %s126, 1
    %s128 = scalar_select %p125, %s126, %s127
    %p131 = pneg %p125
    %p132 = scmp.eq.s32.totalorder %s26, 3
    %p133 = por %p131, %p132
    %p134 = scmp.ne.s32.totalorder %s126, %s129
    %p135 = scmp.eq.s32.totalorder %s26, 0
    %p136 = por %p134, %p135
    %p137 = scmp.ne.s32.totalorder %s126, %s129
    %p138 = scmp.eq.s32.totalorder %s31, 3
    %p139 = por %p137, %p138
    %p140 = scmp.ne.s32.totalorder %s129, %s130
    %p141 = scmp.eq.s32.totalorder %s31, 0
    %p142 = por %p140, %p141
    %p143 = scmp.ne.s32.totalorder %s129, %s130
    %p144 = scmp.eq.s32.totalorder %s32, 3
    %p145 = por %p143, %p144
    %p147 = scmp.ne.s32.totalorder %s130, %s146
    %p148 = scmp.eq.s32.totalorder %s32, 0
    %p149 = por %p147, %p148
    %s150 = ssub.s32 %s34, %s41
    %p151 = scmp.eq.s32.totalorder %s150, 0
    %s153 = sadd.s32 %s152, 1
    %s154 = scalar_select %p151, %s152, %s153
    %p157 = pneg %p151
    %p158 = scmp.eq.s32.totalorder %s26, 3
    %p159 = por %p157, %p158
    %p160 = scmp.ne.s32.totalorder %s152, %s155
    %p161 = scmp.eq.s32.totalorder %s26, 0
    %p162 = por %p160, %p161
    %p163 = scmp.ne.s32.totalorder %s152, %s155
    %p164 = scmp.eq.s32.totalorder %s31, 3
    %p165 = por %p163, %p164
    %p166 = scmp.ne.s32.totalorder %s155, %s156
    %p167 = scmp.eq.s32.totalorder %s31, 0
    %p168 = por %p166, %p167
    %p169 = scmp.ne.s32.totalorder %s155, %s156
    %p170 = scmp.eq.s32.totalorder %s32, 3
    %p171 = por %p169, %p170
    %p173 = scmp.ne.s32.totalorder %s156, %s172
    %p174 = scmp.eq.s32.totalorder %s32, 0
    %p175 = por %p173, %p174
    %s176 = ssub.s32 %s34, %s41
    %p177 = scmp.eq.s32.totalorder %s176, 0
    %s179 = sadd.s32 %s178, 1
    %s180 = scalar_select %p177, %s178, %s179
    %p183 = pneg %p177
    %p184 = scmp.eq.s32.totalorder %s26, 3
    %p185 = por %p183, %p184
    %p186 = scmp.ne.s32.totalorder %s178, %s181
    %p187 = scmp.eq.s32.totalorder %s26, 0
    %p188 = por %p186, %p187
    %p189 = scmp.ne.s32.totalorder %s178, %s181
    %p190 = scmp.eq.s32.totalorder %s31, 3
    %p191 = por %p189, %p190
    %p192 = scmp.ne.s32.totalorder %s181, %s182
    %p193 = scmp.eq.s32.totalorder %s31, 0
    %p194 = por %p192, %p193
    %p195 = scmp.ne.s32.totalorder %s181, %s182
    %p196 = scmp.eq.s32.totalorder %s32, 3
    %p197 = por %p195, %p196
    %p199 = scmp.ne.s32.totalorder %s182, %s198
    %p200 = scmp.eq.s32.totalorder %s32, 0
    %p201 = por %p199, %p200
    %s202 = ssub.s32 %s34, %s41
    %p203 = scmp.eq.s32.totalorder %s202, 0
    %s205 = sadd.s32 %s204, 1
    %s206 = scalar_select %p203, %s204, %s205
    %p209 = pneg %p203
    %p210 = scmp.eq.s32.totalorder %s26, 3
    %p211 = por %p209, %p210
    %p212 = scmp.ne.s32.totalorder %s204, %s207
    %p213 = scmp.eq.s32.totalorder %s26, 0
    %p214 = por %p212, %p213
    %p215 = scmp.ne.s32.totalorder %s204, %s207
    %p216 = scmp.eq.s32.totalorder %s31, 3
    %p217 = por %p215, %p216
    %p218 = scmp.ne.s32.totalorder %s207, %s208
    %p219 = scmp.eq.s32.totalorder %s31, 0
    %p220 = por %p218, %p219
    %p221 = scmp.ne.s32.totalorder %s207, %s208
    %p222 = scmp.eq.s32.totalorder %s32, 3
    %p223 = por %p221, %p222
    %p225 = scmp.ne.s32.totalorder %s208, %s224
    %p226 = scmp.eq.s32.totalorder %s32, 0
    %p227 = por %p225, %p226
    %s228 = ssub.s32 %s34, %s41
    %p229 = scmp.eq.s32.totalorder %s228, 0
    %s231 = sadd.s32 %s230, 1
    %s232 = scalar_select %p229, %s230, %s231
    %p235 = pneg %p229
    %p236 = scmp.eq.s32.totalorder %s26, 3
    %p237 = por %p235, %p236
    %p238 = scmp.ne.s32.totalorder %s230, %s233
    %p239 = scmp.eq.s32.totalorder %s26, 0
    %p240 = por %p238, %p239
    %p241 = scmp.ne.s32.totalorder %s230, %s233
    %p242 = scmp.eq.s32.totalorder %s31, 3
    %p243 = por %p241, %p242
    %p244 = scmp.ne.s32.totalorder %s233, %s234
    %p245 = scmp.eq.s32.totalorder %s31, 0
    %p246 = por %p244, %p245
    %p247 = scmp.ne.s32.totalorder %s233, %s234
    %p248 = scmp.eq.s32.totalorder %s32, 3
    %p249 = por %p247, %p248
    %p251 = scmp.ne.s32.totalorder %s234, %s250
    %p252 = scmp.eq.s32.totalorder %s32, 0
    %p253 = por %p251, %p252
    %s254 = ssub.s32 %s34, %s41
    %p255 = scmp.eq.s32.totalorder %s254, 0
    %s257 = sadd.s32 %s256, 1
    %s258 = scalar_select %p255, %s256, %s257
    %p261 = pneg %p255
    %p262 = scmp.eq.s32.totalorder %s26, 3
    %p263 = por %p261, %p262
    %p264 = scmp.ne.s32.totalorder %s256, %s259
    %p265 = scmp.eq.s32.totalorder %s26, 0
    %p266 = por %p264, %p265
    %p267 = scmp.ne.s32.totalorder %s256, %s259
    %p268 = scmp.eq.s32.totalorder %s31, 3
    %p269 = por %p267, %p268
    %p270 = scmp.ne.s32.totalorder %s259, %s260
    %p271 = scmp.eq.s32.totalorder %s31, 0
    %p272 = por %p270, %p271
    %p273 = scmp.ne.s32.totalorder %s259, %s260
    %p274 = scmp.eq.s32.totalorder %s32, 3
    %p275 = por %p273, %p274
    %p277 = scmp.ne.s32.totalorder %s260, %s276
    %p278 = scmp.eq.s32.totalorder %s32, 0
    %p279 = por %p277, %p278
    %s280 = ssub.s32 %s34, %s41
    %p281 = scmp.eq.s32.totalorder %s280, 0
    %s283 = sadd.s32 %s282, 1
    %s284 = scalar_select %p281, %s282, %s283
    %p287 = pneg %p281
    %p288 = scmp.eq.s32.totalorder %s26, 3
    %p289 = por %p287, %p288
    %p290 = scmp.ne.s32.totalorder %s282, %s285
    %p291 = scmp.eq.s32.totalorder %s26, 0
    %p292 = por %p290, %p291
    %p293 = scmp.ne.s32.totalorder %s282, %s285
    %p294 = scmp.eq.s32.totalorder %s31, 3
    %p295 = por %p293, %p294
    %p296 = scmp.ne.s32.totalorder %s285, %s286
    %p297 = scmp.eq.s32.totalorder %s31, 0
    %p298 = por %p296, %p297
    %p299 = scmp.ne.s32.totalorder %s285, %s286
    %p300 = scmp.eq.s32.totalorder %s32, 3
    %p301 = por %p299, %p300
    %p303 = scmp.ne.s32.totalorder %s286, %s302
    %p304 = scmp.eq.s32.totalorder %s32, 0
    %p305 = por %p303, %p304
    %s306 = ssub.s32 %s34, %s41
    %p307 = scmp.eq.s32.totalorder %s306, 0
    %s309 = sadd.s32 %s308, 1
    %s310 = scalar_select %p307, %s308, %s309
    %p313 = pneg %p307
    %p314 = scmp.eq.s32.totalorder %s26, 3
    %p315 = por %p313, %p314
    %p316 = scmp.ne.s32.totalorder %s308, %s311
    %p317 = scmp.eq.s32.totalorder %s26, 0
    %p318 = por %p316, %p317
    %p319 = scmp.ne.s32.totalorder %s308, %s311
    %p320 = scmp.eq.s32.totalorder %s31, 3
    %p321 = por %p319, %p320
    %p322 = scmp.ne.s32.totalorder %s311, %s312
    %p323 = scmp.eq.s32.totalorder %s31, 0
    %p324 = por %p322, %p323
    %p325 = scmp.ne.s32.totalorder %s311, %s312
    %p326 = scmp.eq.s32.totalorder %s32, 3
    %p327 = por %p325, %p326
    %p329 = scmp.ne.s32.totalorder %s312, %s328
    %p330 = scmp.eq.s32.totalorder %s32, 0
    %p331 = por %p329, %p330
    %s332 = ssub.s32 %s34, %s41
    %p333 = scmp.eq.s32.totalorder %s332, 0
    %s335 = sadd.s32 %s334, 1
    %s336 = scalar_select %p333, %s334, %s335
    %p339 = pneg %p333
    %p340 = scmp.eq.s32.totalorder %s26, 3
    %p341 = por %p339, %p340
    %p342 = scmp.ne.s32.totalorder %s334, %s337
    %p343 = scmp.eq.s32.totalorder %s26, 0
    %p344 = por %p342, %p343
    %p345 = scmp.ne.s32.totalorder %s334, %s337
    %p346 = scmp.eq.s32.totalorder %s31, 3
    %p347 = por %p345, %p346
    %p348 = scmp.ne.s32.totalorder %s337, %s338
    %p349 = scmp.eq.s32.totalorder %s31, 0
    %p350 = por %p348, %p349
    %p351 = scmp.ne.s32.totalorder %s337, %s338
    %p352 = scmp.eq.s32.totalorder %s32, 3
    %p353 = por %p351, %p352
    %p355 = scmp.ne.s32.totalorder %s338, %s354
    %p356 = scmp.eq.s32.totalorder %s32, 0
    %p357 = por %p355, %p356
    %s358 = ssub.s32 %s34, %s41
    %p359 = scmp.eq.s32.totalorder %s358, 0
    %s361 = sadd.s32 %s360, 1
    %s362 = scalar_select %p359, %s360, %s361
    %p365 = pneg %p359
    %p366 = scmp.eq.s32.totalorder %s26, 3
    %p367 = por %p365, %p366
    %p368 = scmp.ne.s32.totalorder %s360, %s363
    %p369 = scmp.eq.s32.totalorder %s26, 0
    %p370 = por %p368, %p369
    %p371 = scmp.ne.s32.totalorder %s360, %s363
    %p372 = scmp.eq.s32.totalorder %s31, 3
    %p373 = por %p371, %p372
    %p374 = scmp.ne.s32.totalorder %s363, %s364
    %p375 = scmp.eq.s32.totalorder %s31, 0
    %p376 = por %p374, %p375
    %p377 = scmp.ne.s32.totalorder %s363, %s364
    %p378 = scmp.eq.s32.totalorder %s32, 3
    %p379 = por %p377, %p378
    %p381 = scmp.ne.s32.totalorder %s364, %s380
    %p382 = scmp.eq.s32.totalorder %s32, 0
    %p383 = por %p381, %p382
    %s384 = ssub.s32 %s34, %s41
    %p385 = scmp.eq.s32.totalorder %s384, 0
    %s387 = sadd.s32 %s386, 1
    %s388 = scalar_select %p385, %s386, %s387
    %p391 = pneg %p385
    %p392 = scmp.eq.s32.totalorder %s26, 3
    %p393 = por %p391, %p392
    %p394 = scmp.ne.s32.totalorder %s386, %s389
    %p395 = scmp.eq.s32.totalorder %s26, 0
    %p396 = por %p394, %p395
    %p397 = scmp.ne.s32.totalorder %s386, %s389
    %p398 = scmp.eq.s32.totalorder %s31, 3
    %p399 = por %p397, %p398
    %p400 = scmp.ne.s32.totalorder %s389, %s390
    %p401 = scmp.eq.s32.totalorder %s31, 0
    %p402 = por %p400, %p401
    %p403 = scmp.ne.s32.totalorder %s389, %s390
    %p404 = scmp.eq.s32.totalorder %s32, 3
    %p405 = por %p403, %p404
    %p407 = scmp.ne.s32.totalorder %s390, %s406
    %p408 = scmp.eq.s32.totalorder %s32, 0
    %p409 = por %p407, %p408
    %s410 = ssub.s32 %s34, %s41
    %p411 = scmp.eq.s32.totalorder %s410, 0
    %s413 = sadd.s32 %s412, 1
    %s414 = scalar_select %p411, %s412, %s413
    %p417 = pneg %p411
    %p418 = scmp.eq.s32.totalorder %s26, 3
    %p419 = por %p417, %p418
    %p420 = scmp.ne.s32.totalorder %s412, %s415
    %p421 = scmp.eq.s32.totalorder %s26, 0
    %p422 = por %p420, %p421
    %p423 = scmp.ne.s32.totalorder %s412, %s415
    %p424 = scmp.eq.s32.totalorder %s31, 3
    %p425 = por %p423, %p424
    %p426 = scmp.ne.s32.totalorder %s415, %s416
    %p427 = scmp.eq.s32.totalorder %s31, 0
    %p428 = por %p426, %p427
    %p429 = scmp.ne.s32.totalorder %s415, %s416
    %p430 = scmp.eq.s32.totalorder %s32, 3
    %p431 = por %p429, %p430
    %p433 = scmp.ne.s32.totalorder %s416, %s432
    %p434 = scmp.eq.s32.totalorder %s32, 0
    %p435 = por %p433, %p434
    %s436 = ssub.s32 %s34, %s41
    %p437 = scmp.eq.s32.totalorder %s436, 0
    %s439 = sadd.s32 %s438, 1
    %s440 = scalar_select %p437, %s438, %s439
    %p443 = pneg %p437
    %p444 = scmp.eq.s32.totalorder %s26, 3
    %p445 = por %p443, %p444
    %p446 = scmp.ne.s32.totalorder %s438, %s441
    %p447 = scmp.eq.s32.totalorder %s26, 0
    %p448 = por %p446, %p447
    %p449 = scmp.ne.s32.totalorder %s438, %s441
    %p450 = scmp.eq.s32.totalorder %s31, 3
    %p451 = por %p449, %p450
    %p452 = scmp.ne.s32.totalorder %s441, %s442
    %p453 = scmp.eq.s32.totalorder %s31, 0
    %p454 = por %p452, %p453
    %p455 = scmp.ne.s32.totalorder %s441, %s442
    %p456 = scmp.eq.s32.totalorder %s32, 3
    %p457 = por %p455, %p456
    %p459 = scmp.ne.s32.totalorder %s442, %s458
    %p460 = scmp.eq.s32.totalorder %s32, 0
    %p461 = por %p459, %p460
    %s462 = ssub.s32 %s34, %s41
    %p463 = scmp.eq.s32.totalorder %s462, 0
    %s465 = sadd.s32 %s464, 1
    %s466 = scalar_select %p463, %s464, %s465
    %p469 = pneg %p463
    %p470 = scmp.eq.s32.totalorder %s26, 3
    %p471 = por %p469, %p470
    %p472 = scmp.ne.s32.totalorder %s464, %s467
    %p473 = scmp.eq.s32.totalorder %s26, 0
    %p474 = por %p472, %p473
    %p475 = scmp.ne.s32.totalorder %s464, %s467
    %p476 = scmp.eq.s32.totalorder %s31, 3
    %p477 = por %p475, %p476
    %p478 = scmp.ne.s32.totalorder %s467, %s468
    %p479 = scmp.eq.s32.totalorder %s31, 0
    %p480 = por %p478, %p479
    %p481 = scmp.ne.s32.totalorder %s467, %s468
    %p482 = scmp.eq.s32.totalorder %s32, 3
    %p483 = por %p481, %p482
    %p485 = scmp.ne.s32.totalorder %s468, %s484
    %p486 = scmp.eq.s32.totalorder %s32, 0
    %p487 = por %p485, %p486
    %s488 = ssub.s32 %s34, %s41
    %p489 = scmp.eq.s32.totalorder %s488, 0
    %s491 = sadd.s32 %s490, 1
    %s492 = scalar_select %p489, %s490, %s491
    %p495 = pneg %p489
    %p496 = scmp.eq.s32.totalorder %s26, 3
    %p497 = por %p495, %p496
    %p498 = scmp.ne.s32.totalorder %s490, %s493
    %p499 = scmp.eq.s32.totalorder %s26, 0
    %p500 = por %p498, %p499
    %p501 = scmp.ne.s32.totalorder %s490, %s493
    %p502 = scmp.eq.s32.totalorder %s31, 3
    %p503 = por %p501, %p502
    %p504 = scmp.ne.s32.totalorder %s493, %s494
    %p505 = scmp.eq.s32.totalorder %s31, 0
    %p506 = por %p504, %p505
    %p507 = scmp.ne.s32.totalorder %s493, %s494
    %p508 = scmp.eq.s32.totalorder %s32, 3
    %p509 = por %p507, %p508
    %p511 = scmp.ne.s32.totalorder %s494, %s510
    %p512 = scmp.eq.s32.totalorder %s32, 0
    %p513 = por %p511, %p512
    %s515 = sadd.s32 %s514, 1
    %p518 = scmp.eq.s32.totalorder %s26, 3
    %p519 = scmp.ne.s32.totalorder %s514, %s516
    %p520 = scmp.eq.s32.totalorder %s26, 0
    %p521 = por %p519, %p520
    %p522 = scmp.ne.s32.totalorder %s514, %s516
    %p523 = scmp.eq.s32.totalorder %s31, 3
    %p524 = por %p522, %p523
    %p525 = scmp.ne.s32.totalorder %s516, %s517
    %p526 = scmp.eq.s32.totalorder %s31, 0
    %p527 = por %p525, %p526
    %p528 = scmp.ne.s32.totalorder %s516, %s517
    %p529 = scmp.eq.s32.totalorder %s32, 3
    %p530 = por %p528, %p529
    %p532 = scmp.ne.s32.totalorder %s517, %s531
    %p533 = scmp.eq.s32.totalorder %s32, 0
    %p534 = por %p532, %p533
    %s536 = sadd.s32 %s535, 1
    %p539 = scmp.eq.s32.totalorder %s26, 3
    %p540 = scmp.ne.s32.totalorder %s535, %s537
    %p541 = scmp.eq.s32.totalorder %s26, 0
    %p542 = por %p540, %p541
    %p543 = scmp.ne.s32.totalorder %s535, %s537
    %p544 = scmp.eq.s32.totalorder %s31, 3
    %p545 = por %p543, %p544
    %p546 = scmp.ne.s32.totalorder %s537, %s538
    %p547 = scmp.eq.s32.totalorder %s31, 0
    %p548 = por %p546, %p547
    %p549 = scmp.ne.s32.totalorder %s537, %s538
    %p550 = scmp.eq.s32.totalorder %s32, 3
    %p551 = por %p549, %p550
    %p553 = scmp.ne.s32.totalorder %s538, %s552
    %p554 = scmp.eq.s32.totalorder %s32, 0
    %p555 = por %p553, %p554
    %s556 = ssub.s32 %s33, %s45
    %p557 = scmp.eq.s32.totalorder %s556, 0
    %s559 = sadd.s32 %s558, 1
    %s560 = scalar_select %p557, %s558, %s559
    %p563 = pneg %p557
    %p564 = scmp.eq.s32.totalorder %s26, 3
    %p565 = por %p563, %p564
    %p566 = scmp.ne.s32.totalorder %s558, %s561
    %p567 = scmp.eq.s32.totalorder %s26, 0
    %p568 = por %p566, %p567
    %p569 = scmp.ne.s32.totalorder %s558, %s561
    %p570 = scmp.eq.s32.totalorder %s31, 3
    %p571 = por %p569, %p570
    %p572 = scmp.ne.s32.totalorder %s561, %s562
    %p573 = scmp.eq.s32.totalorder %s31, 0
    %p574 = por %p572, %p573
    %p575 = scmp.ne.s32.totalorder %s561, %s562
    %p576 = scmp.eq.s32.totalorder %s32, 3
    %p577 = por %p575, %p576
    %p579 = scmp.ne.s32.totalorder %s562, %s578
    %p580 = scmp.eq.s32.totalorder %s32, 0
    %p581 = por %p579, %p580
    %p582 = scmp.le.s32.totalorder 1, %s26
    %p583 = scmp.lt.s32.totalorder %s26, 5
    %p584 = pnand %p582, %p583
    %p585 = pneg %p584
    // Predicated region
    $region9: #{_lambda_.2} parent=5 // pred_check
      _
    $region10: #{_lambda_.2} parent=5 // pred_check_branch
      %587 = sbr.rel (%p584) target = $region12
    $region11: #{_lambda_.2} parent=5 // pred_region
      %s588 = ssub.s32 %s26, 1
      // Predicated region
      $region13: #{_lambda_.2} parent=11 // pred_check
        %p589 = pneg %p527
      $region14: #{_lambda_.2} parent=11 // pred_check_branch
        %591 = sbr.rel (%p589) target = $region16
      $region15: #{_lambda_.2} parent=11 // pred_region
        _
      $region16: #{_lambda_.2} parent=11 // pred_fallthru
        _
      // Predicated region
      $region17: #{_lambda_.2} parent=11 // pred_check
        %p592 = pneg %p548
      $region18: #{_lambda_.2} parent=11 // pred_check_branch
        %594 = sbr.rel (%p592) target = $region20
      $region19: #{_lambda_.2} parent=11 // pred_region
        _
      $region20: #{_lambda_.2} parent=11 // pred_fallthru
        _
    $region12: #{_lambda_.2} parent=5 // pred_fallthru
      _
    %p595 = scmp.lt.s32.totalorder %s26, 4
    // Predicated region
    $region21: #{_lambda_.2} parent=5 // pred_check
      %p596 = pneg %p595
    $region22: #{_lambda_.2} parent=5 // pred_check_branch
      %598 = sbr.rel (%p596) target = $region24
    $region23: #{_lambda_.2} parent=5 // pred_region
      // Predicated region
      $region25: #{_lambda_.2} parent=23 // pred_check
        %p599 = pneg %p58
      $region26: #{_lambda_.2} parent=23 // pred_check_branch
        %601 = sbr.rel (%p599) target = $region28
      $region27: #{_lambda_.2} parent=23 // pred_region
        %p602 = scmp.lt.s32.totalorder %s33, 1
        %s603 = scalar_select %p602, %s33, 1
        %s604 = smul.addr %s603, 8
        %s605 = scalar_lea.vmem %s0, %s604
      $region28: #{_lambda_.2} parent=23 // pred_fallthru
        _
      // Predicated region
      $region29: #{_lambda_.2} parent=23 // pred_check
        %p606 = pneg %p84
      $region30: #{_lambda_.2} parent=23 // pred_check_branch
        %608 = sbr.rel (%p606) target = $region32
      $region31: #{_lambda_.2} parent=23 // pred_region
        %p609 = scmp.lt.s32.totalorder %s33, 1
        %s610 = scalar_select %p609, %s33, 1
        %s611 = smul.addr %s610, 2
        %s612 = scalar_lea.vmem %s1, %s611
      $region32: #{_lambda_.2} parent=23 // pred_fallthru
        _
      // Predicated region
      $region33: #{_lambda_.2} parent=23 // pred_check
        %p613 = pneg %p110
      $region34: #{_lambda_.2} parent=23 // pred_check_branch
        %615 = sbr.rel (%p613) target = $region36
      $region35: #{_lambda_.2} parent=23 // pred_region
        %p616 = scmp.lt.s32.totalorder %s34, 1
        %s617 = scalar_select %p616, %s34, 1
        %s618 = scalar_lea.vmem %s2, %s617
      $region36: #{_lambda_.2} parent=23 // pred_fallthru
        _
      // Predicated region
      $region37: #{_lambda_.2} parent=23 // pred_check
        %p619 = pneg %p136
      $region38: #{_lambda_.2} parent=23 // pred_check_branch
        %621 = sbr.rel (%p619) target = $region40
      $region39: #{_lambda_.2} parent=23 // pred_region
        %p622 = scmp.lt.s32.totalorder %s34, 1
        %s623 = scalar_select %p622, %s34, 1
        %s624 = scalar_lea.vmem %s3, %s623
      $region40: #{_lambda_.2} parent=23 // pred_fallthru
        _
      // Predicated region
      $region41: #{_lambda_.2} parent=23 // pred_check
        %p625 = pneg %p162
      $region42: #{_lambda_.2} parent=23 // pred_check_branch
        %627 = sbr.rel (%p625) target = $region44
      $region43: #{_lambda_.2} parent=23 // pred_region
        %p628 = scmp.lt.s32.totalorder %s34, 1
        %s629 = scalar_select %p628, %s34, 1
        %s630 = scalar_lea.vmem %s4, %s629
      $region44: #{_lambda_.2} parent=23 // pred_fallthru
        _
      // Predicated region
      $region45: #{_lambda_.2} parent=23 // pred_check
        %p631 = pneg %p188
      $region46: #{_lambda_.2} parent=23 // pred_check_branch
        %633 = sbr.rel (%p631) target = $region48
      $region47: #{_lambda_.2} parent=23 // pred_region
        %p634 = scmp.lt.s32.totalorder %s34, 1
        %s635 = scalar_select %p634, %s34, 1
        %s636 = scalar_lea.vmem %s5, %s635
      $region48: #{_lambda_.2} parent=23 // pred_fallthru
        _
      // Predicated region
      $region49: #{_lambda_.2} parent=23 // pred_check
        %p637 = pneg %p214
      $region50: #{_lambda_.2} parent=23 // pred_check_branch
        %639 = sbr.rel (%p637) target = $region52
      $region51: #{_lambda_.2} parent=23 // pred_region
        %p640 = scmp.lt.s32.totalorder %s34, 1
        %s641 = scalar_select %p640, %s34, 1
        %s642 = smul.addr %s641, 4
        %s643 = smul.addr %s642, 4
        %s644 = scalar_lea.vmem %s6, %s643
      $region52: #{_lambda_.2} parent=23 // pred_fallthru
        _
      // Predicated region
      $region53: #{_lambda_.2} parent=23 // pred_check
        %p645 = pneg %p240
      $region54: #{_lambda_.2} parent=23 // pred_check_branch
        %647 = sbr.rel (%p645) target = $region56
      $region55: #{_lambda_.2} parent=23 // pred_region
        %p648 = scmp.lt.s32.totalorder %s34, 1
        %s649 = scalar_select %p648, %s34, 1
        %s650 = scalar_lea.vmem %s7, %s649
      $region56: #{_lambda_.2} parent=23 // pred_fallthru
        _
      // Predicated region
      $region57: #{_lambda_.2} parent=23 // pred_check
        %p651 = pneg %p266
      $region58: #{_lambda_.2} parent=23 // pred_check_branch
        %653 = sbr.rel (%p651) target = $region60
      $region59: #{_lambda_.2} parent=23 // pred_region
        %p654 = scmp.lt.s32.totalorder %s34, 1
        %s655 = scalar_select %p654, %s34, 1
        %s656 = smul.addr %s655, 4
        %s657 = smul.addr %s656, 4
        %s658 = scalar_lea.vmem %s8, %s657
      $region60: #{_lambda_.2} parent=23 // pred_fallthru
        _
      // Predicated region
      $region61: #{_lambda_.2} parent=23 // pred_check
        %p659 = pneg %p292
      $region62: #{_lambda_.2} parent=23 // pred_check_branch
        %661 = sbr.rel (%p659) target = $region64
      $region63: #{_lambda_.2} parent=23 // pred_region
        %p662 = scmp.lt.s32.totalorder %s34, 1
        %s663 = scalar_select %p662, %s34, 1
        %s664 = scalar_lea.vmem %s9, %s663
      $region64: #{_lambda_.2} parent=23 // pred_fallthru
        _
      // Predicated region
      $region65: #{_lambda_.2} parent=23 // pred_check
        %p665 = pneg %p318
      $region66: #{_lambda_.2} parent=23 // pred_check_branch
        %667 = sbr.rel (%p665) target = $region68
      $region67: #{_lambda_.2} parent=23 // pred_region
        %p668 = scmp.lt.s32.totalorder %s34, 1
        %s669 = scalar_select %p668, %s34, 1
        %s670 = smul.addr %s669, 4
        %s671 = smul.addr %s670, 4
        %s672 = scalar_lea.vmem %s10, %s671
      $region68: #{_lambda_.2} parent=23 // pred_fallthru
        _
      // Predicated region
      $region69: #{_lambda_.2} parent=23 // pred_check
        %p673 = pneg %p344
      $region70: #{_lambda_.2} parent=23 // pred_check_branch
        %675 = sbr.rel (%p673) target = $region72
      $region71: #{_lambda_.2} parent=23 // pred_region
        %p676 = scmp.lt.s32.totalorder %s34, 1
        %s677 = scalar_select %p676, %s34, 1
        %s678 = scalar_lea.vmem %s11, %s677
      $region72: #{_lambda_.2} parent=23 // pred_fallthru
        _
      // Predicated region
      $region73: #{_lambda_.2} parent=23 // pred_check
        %p679 = pneg %p370
      $region74: #{_lambda_.2} parent=23 // pred_check_branch
        %681 = sbr.rel (%p679) target = $region76
      $region75: #{_lambda_.2} parent=23 // pred_region
        %p682 = scmp.lt.s32.totalorder %s34, 1
        %s683 = scalar_select %p682, %s34, 1
        %s684 = scalar_lea.vmem %s12, %s683
      $region76: #{_lambda_.2} parent=23 // pred_fallthru
        _
      // Predicated region
      $region77: #{_lambda_.2} parent=23 // pred_check
        %p685 = pneg %p396
      $region78: #{_lambda_.2} parent=23 // pred_check_branch
        %687 = sbr.rel (%p685) target = $region80
      $region79: #{_lambda_.2} parent=23 // pred_region
        %p688 = scmp.lt.s32.totalorder %s34, 1
        %s689 = scalar_select %p688, %s34, 1
        %s690 = scalar_lea.vmem %s13, %s689
      $region80: #{_lambda_.2} parent=23 // pred_fallthru
        _
      // Predicated region
      $region81: #{_lambda_.2} parent=23 // pred_check
        %p691 = pneg %p422
      $region82: #{_lambda_.2} parent=23 // pred_check_branch
        %693 = sbr.rel (%p691) target = $region84
      $region83: #{_lambda_.2} parent=23 // pred_region
        %p694 = scmp.lt.s32.totalorder %s34, 1
        %s695 = scalar_select %p694, %s34, 1
        %s696 = smul.addr %s695, 4
        %s697 = smul.addr %s696, 4
        %s698 = scalar_lea.vmem %s14, %s697
      $region84: #{_lambda_.2} parent=23 // pred_fallthru
        _
      // Predicated region
      $region85: #{_lambda_.2} parent=23 // pred_check
        %p699 = pneg %p448
      $region86: #{_lambda_.2} parent=23 // pred_check_branch
        %701 = sbr.rel (%p699) target = $region88
      $region87: #{_lambda_.2} parent=23 // pred_region
        %p702 = scmp.lt.s32.totalorder %s34, 1
        %s703 = scalar_select %p702, %s34, 1
        %s704 = scalar_lea.vmem %s15, %s703
      $region88: #{_lambda_.2} parent=23 // pred_fallthru
        _
      // Predicated region
      $region89: #{_lambda_.2} parent=23 // pred_check
        %p705 = pneg %p474
      $region90: #{_lambda_.2} parent=23 // pred_check_branch
        %707 = sbr.rel (%p705) target = $region92
      $region91: #{_lambda_.2} parent=23 // pred_region
        %p708 = scmp.lt.s32.totalorder %s34, 1
        %s709 = scalar_select %p708, %s34, 1
        %s710 = smul.addr %s709, 8
        %s711 = smul.addr %s710, 4
        %s712 = scalar_lea.vmem %s16, %s711
      $region92: #{_lambda_.2} parent=23 // pred_fallthru
        _
      // Predicated region
      $region93: #{_lambda_.2} parent=23 // pred_check
        %p713 = pneg %p500
      $region94: #{_lambda_.2} parent=23 // pred_check_branch
        %715 = sbr.rel (%p713) target = $region96
      $region95: #{_lambda_.2} parent=23 // pred_region
        %p716 = scmp.lt.s32.totalorder %s34, 1
        %s717 = scalar_select %p716, %s34, 1
        %s718 = scalar_lea.vmem %s17, %s717
      $region96: #{_lambda_.2} parent=23 // pred_fallthru
        _
    $region24: #{_lambda_.2} parent=5 // pred_fallthru
      _
    %p719 = scmp.le.s32.totalorder 1, %s26
    %p720 = scmp.lt.s32.totalorder %s26, 5
    %p721 = pnand %p719, %p720
    %p722 = pneg %p721
    // Predicated region
    $region97: #{_lambda_.2} parent=5 // pred_check
      _
    $region98: #{_lambda_.2} parent=5 // pred_check_branch
      %724 = sbr.rel (%p721) target = $region100
    $region99: #{_lambda_.2} parent=5 // pred_region
      %s725 = ssub.s32 %s26, 1
      %p726 = scmp.lt.s32.totalorder %s35, 1
      %s727 = scalar_select %p726, %s35, 1
      %s728 = smul.addr %s727, 8
      %s729 = scalar_lea.vmem %s0, %s728
      %p730 = pneg %p64
      %p731 = pneg %p61
      %p732 = scmp.lt.s32.totalorder %s35, 1
      %s733 = scalar_select %p732, %s35, 1
      %s734 = smul.addr %s733, 2
      %s735 = scalar_lea.vmem %s1, %s734
      %p736 = pneg %p90
      %p737 = pneg %p87
      %p738 = scmp.lt.s32.totalorder %s36, 1
      %s739 = scalar_select %p738, %s36, 1
      %s740 = scalar_lea.vmem %s2, %s739
      %p741 = pneg %p116
      %p742 = pneg %p113
      %p743 = scmp.lt.s32.totalorder %s36, 1
      %s744 = scalar_select %p743, %s36, 1
      %s745 = scalar_lea.vmem %s3, %s744
      %p746 = pneg %p142
      %p747 = pneg %p139
      %p748 = scmp.lt.s32.totalorder %s36, 1
      %s749 = scalar_select %p748, %s36, 1
      %s750 = scalar_lea.vmem %s4, %s749
      %p751 = pneg %p168
      %p752 = pneg %p165
      %p753 = scmp.lt.s32.totalorder %s36, 1
      %s754 = scalar_select %p753, %s36, 1
      %s755 = scalar_lea.vmem %s5, %s754
      %p756 = pneg %p194
      %p757 = pneg %p191
      %p758 = scmp.lt.s32.totalorder %s36, 1
      %s759 = scalar_select %p758, %s36, 1
      %s760 = smul.addr %s759, 4
      %s761 = smul.addr %s760, 4
      %s762 = scalar_lea.vmem %s6, %s761
      %p763 = pneg %p220
      %p764 = pneg %p217
      %p765 = scmp.lt.s32.totalorder %s36, 1
      %s766 = scalar_select %p765, %s36, 1
      %s767 = scalar_lea.vmem %s7, %s766
      %p768 = pneg %p246
      %p769 = pneg %p243
      %p770 = scmp.lt.s32.totalorder %s36, 1
      %s771 = scalar_select %p770, %s36, 1
      %s772 = smul.addr %s771, 4
      %s773 = smul.addr %s772, 4
      %s774 = scalar_lea.vmem %s8, %s773
      %p775 = pneg %p272
      %p776 = pneg %p269
      %p777 = scmp.lt.s32.totalorder %s36, 1
      %s778 = scalar_select %p777, %s36, 1
      %s779 = scalar_lea.vmem %s9, %s778
      %p780 = pneg %p298
      %p781 = pneg %p295
      %p782 = scmp.lt.s32.totalorder %s36, 1
      %s783 = scalar_select %p782, %s36, 1
      %s784 = smul.addr %s783, 4
      %s785 = smul.addr %s784, 4
      %s786 = scalar_lea.vmem %s10, %s785
      %p787 = pneg %p324
      %p788 = pneg %p321
      %p789 = scmp.lt.s32.totalorder %s36, 1
      %s790 = scalar_select %p789, %s36, 1
      %s791 = scalar_lea.vmem %s11, %s790
      %p792 = pneg %p350
      %p793 = pneg %p347
      %p794 = scmp.lt.s32.totalorder %s36, 1
      %s795 = scalar_select %p794, %s36, 1
      %s796 = scalar_lea.vmem %s12, %s795
      %p797 = pneg %p376
      %p798 = pneg %p373
      %p799 = scmp.lt.s32.totalorder %s36, 1
      %s800 = scalar_select %p799, %s36, 1
      %s801 = scalar_lea.vmem %s13, %s800
      %p802 = pneg %p402
      %p803 = pneg %p399
      %p804 = scmp.lt.s32.totalorder %s36, 1
      %s805 = scalar_select %p804, %s36, 1
      %s806 = smul.addr %s805, 4
      %s807 = smul.addr %s806, 4
      %s808 = scalar_lea.vmem %s14, %s807
      %p809 = pneg %p428
      %p810 = pneg %p425
      %p811 = scmp.lt.s32.totalorder %s36, 1
      %s812 = scalar_select %p811, %s36, 1
      %s813 = scalar_lea.vmem %s15, %s812
      %p814 = pneg %p454
      %p815 = pneg %p451
      %p816 = scmp.lt.s32.totalorder %s36, 1
      %s817 = scalar_select %p816, %s36, 1
      %s818 = smul.addr %s817, 8
      %s819 = smul.addr %s818, 4
      %s820 = scalar_lea.vmem %s16, %s819
      %p821 = pneg %p480
      %p822 = pneg %p477
      %p823 = scmp.lt.s32.totalorder %s36, 1
      %s824 = scalar_select %p823, %s36, 1
      %s825 = scalar_lea.vmem %s17, %s824
      %p826 = pneg %p506
      %p827 = pneg %p503
      %p828 = pneg %p527
      %p829 = pneg %p524
      %p830 = pneg %p548
      %p831 = pneg %p545
      %p832 = pneg %p574
      %p833 = pneg %p571
      %p834 = scmp.lt.s32.totalorder %s35, 1
      %s835 = scalar_select %p834, %s35, 1
      %s836 = smul.addr %s835, 8
      %s837 = scalar_lea.vmem %s20, %s836
      %p838 = scmp.lt.s32.totalorder %s35, 1
      %s839 = scalar_select %p838, %s35, 1
      %s840 = smul.addr %s839, 8
      %s841 = scalar_lea.vmem %s0, %s840
      %p842 = scmp.lt.s32.totalorder %s35, 1
      %s843 = scalar_select %p842, %s35, 1
      %s844 = smul.addr %s843, 2
      %s845 = scalar_lea.vmem %s1, %s844
      %p846 = scmp.lt.s32.totalorder %s36, 1
      %s847 = scalar_select %p846, %s36, 1
      %s848 = scalar_lea.vmem %s2, %s847
      %p849 = scmp.lt.s32.totalorder %s36, 1
      %s850 = scalar_select %p849, %s36, 1
      %s851 = scalar_lea.vmem %s3, %s850
      %p852 = scmp.lt.s32.totalorder %s36, 1
      %s853 = scalar_select %p852, %s36, 1
      %s854 = scalar_lea.vmem %s4, %s853
      %p855 = scmp.lt.s32.totalorder %s36, 1
      %s856 = scalar_select %p855, %s36, 1
      %s857 = scalar_lea.vmem %s5, %s856
      %p858 = scmp.lt.s32.totalorder %s36, 1
      %s859 = scalar_select %p858, %s36, 1
      %s860 = smul.addr %s859, 4
      %s861 = smul.addr %s860, 4
      %s862 = scalar_lea.vmem %s6, %s861
      %p863 = scmp.lt.s32.totalorder %s36, 1
      %s864 = scalar_select %p863, %s36, 1
      %s865 = scalar_lea.vmem %s7, %s864
      %p866 = scmp.lt.s32.totalorder %s36, 1
      %s867 = scalar_select %p866, %s36, 1
      %s868 = smul.addr %s867, 4
      %s869 = smul.addr %s868, 4
      %s870 = scalar_lea.vmem %s8, %s869
      %p871 = scmp.lt.s32.totalorder %s36, 1
      %s872 = scalar_select %p871, %s36, 1
      %s873 = scalar_lea.vmem %s9, %s872
      %p874 = scmp.lt.s32.totalorder %s36, 1
      %s875 = scalar_select %p874, %s36, 1
      %s876 = smul.addr %s875, 4
      %s877 = smul.addr %s876, 4
      %s878 = scalar_lea.vmem %s10, %s877
      %p879 = scmp.lt.s32.totalorder %s36, 1
      %s880 = scalar_select %p879, %s36, 1
      %s881 = scalar_lea.vmem %s11, %s880
      %p882 = scmp.lt.s32.totalorder %s36, 1
      %s883 = scalar_select %p882, %s36, 1
      %s884 = scalar_lea.vmem %s12, %s883
      %p885 = scmp.lt.s32.totalorder %s36, 1
      %s886 = scalar_select %p885, %s36, 1
      %s887 = scalar_lea.vmem %s13, %s886
      %p888 = scmp.lt.s32.totalorder %s36, 1
      %s889 = scalar_select %p888, %s36, 1
      %s890 = smul.addr %s889, 4
      %s891 = smul.addr %s890, 4
      %s892 = scalar_lea.vmem %s14, %s891
      %p893 = scmp.lt.s32.totalorder %s36, 1
      %s894 = scalar_select %p893, %s36, 1
      %s895 = scalar_lea.vmem %s15, %s894
      %p896 = scmp.lt.s32.totalorder %s36, 1
      %s897 = scalar_select %p896, %s36, 1
      %s898 = smul.addr %s897, 8
      %s899 = smul.addr %s898, 4
      %s900 = scalar_lea.vmem %s16, %s899
      %p901 = scmp.lt.s32.totalorder %s36, 1
      %s902 = scalar_select %p901, %s36, 1
      %s903 = scalar_lea.vmem %s17, %s902
      %p904 = scmp.lt.s32.totalorder %s35, 1
      %s905 = scalar_select %p904, %s35, 1
      %s906 = smul.addr %s905, 8
      %s907 = scalar_lea.vmem %s20, %s906
      %p909 = scmp.eq.s32.totalorder %s36, 0
      // Predicated region
      $region101: #{_lambda_.2} parent=99 // pred_check
        %p910 = pneg %p909
      $region102: #{_lambda_.2} parent=99 // pred_check_branch
        %912 = sbr.rel (%p910) target = $region104
      $region103: #{_lambda_.2} parent=99 // pred_region
        %v913 = vld [vmem:[%s841] sm:$0x1f]
        %vm914 = vcmask 258048
        %915 = vst.msk [vmem:[%s907] sm:$0x1f] %vm914, %v913
      $region104: #{_lambda_.2} parent=99 // pred_fallthru
        _
      %v916 = vld [vmem:[%s907] sm:$0x1f]
      %v917 = vld [vmem:[%s845] sm:$0x3]
      %v918 = vld [vmem:[%s848] sm:$0x1]
      %v919 = vld [vmem:[%s851] sm:$0x1]
      %vm920 = vcmask 258048
      %v921 = vsel %vm920, %v916, 0.0
      %922 = vadd.xlane.f32.xlu0 %v921
      %v923 = vpop.xlane.xlu0 %922
      %v924 = vrcp.pop 32.0
      %v925 = vmul.f32 32.0, %v924
      %v926 = vsub.f32 1.0, %v925
      %v927 = vmul.f32 %v924, %v926
      %v928 = vadd.f32 %v924, %v927
      %vm929 = vweird.f32 %v924
      %v930 = vsel %vm929, %v924, %v928
      %v931 = vmul.f32 %v923, %v930
      %v932 = vsub.f32 %v916, %v931
      %v933 = vmul.f32 %v932, %v932
      %v934 = vsel %vm920, %v933, 0.0
      %935 = vadd.xlane.f32.xlu0 %v934
      %v936 = vpop.xlane.xlu0 %935
      %v937 = vmul.f32 %v936, %v930
      %v938 = vadd.f32 %v937, 1e-06
      %v939 = vrsqrt.pop %v938
      %v940 = vmul.f32 %v939, %v938
      %v941 = vmul.f32 %v940, %v939
      %v942 = vmul.f32 0.5, %v941
      %v943 = vsub.f32 1.5, %v942
      %v944 = vmul.f32 %v939, %v943
      %vm945 = vweird.f32 %v938
      %vm946 = vweird.f32 %v939
      %vm947 = vmor %vm945, %vm946
      %v948 = vsel %vm947, %v939, %v944
      %v949 = vmul.f32 %v932, %v948
      %v951 = vperm.slane %v918, 0
      %v953 = vmul.f32 %v949, %v951
      %v955 = vperm.slane %v919, 0
      %v957 = vadd.f32 %v953, %v955
      %v958 = vpack.c.bf16 %v957, %v957
      %v959 = vld [vmem:[%s854] sm:$0x1]
      %v960 = vld [vmem:[%s857] sm:$0x1]
      %vm961 = vcmask 254976
      %v962 = vsel %vm961, %v917, 0.0
      %963 = vadd.xlane.f32.xlu0 %v962
      %v964 = vpop.xlane.xlu0 %963
      %v965 = vmul.f32 %v964, %v930
      %v966 = vsub.f32 %v917, %v965
      %v967 = vmul.f32 %v966, %v966
      %v968 = vsel %vm961, %v967, 0.0
      %969 = vadd.xlane.f32.xlu0 %v968
      %v970 = vpop.xlane.xlu0 %969
      %v971 = vmul.f32 %v970, %v930
      %v972 = vadd.f32 %v971, 1e-06
      %v973 = vrsqrt.pop %v972
      %v974 = vmul.f32 %v973, %v972
      %v975 = vmul.f32 %v974, %v973
      %v976 = vmul.f32 0.5, %v975
      %v977 = vsub.f32 1.5, %v976
      %v978 = vmul.f32 %v973, %v977
      %vm979 = vweird.f32 %v972
      %vm980 = vweird.f32 %v973
      %vm981 = vmor %vm979, %vm980
      %v982 = vsel %vm981, %v973, %v978
      %v983 = vmul.f32 %v966, %v982
      %v985 = vperm.slane %v959, 0
      %v987 = vmul.f32 %v983, %v985
      %v989 = vperm.slane %v960, 0
      %v991 = vadd.f32 %v987, %v989
      %v992 = vpack.c.bf16 %v991, %v991
      %v993 = vld [vmem:[%s862] sm:$0xf]
      %v994 = vld [vmem:[%s862 + $0x4] sm:$0xf]
      %v995 = vld [vmem:[%s862 + $0x8] sm:$0xf]
      %v996 = vld [vmem:[%s862 + $0xc] sm:$0xf]
      %v997 = vld [vmem:[%s865] sm:$0x1]
      %v999 = vperm.slane %v997, 0
      %v1005 = vunpack.c.l.b16 %v993
      %v1006 = vunpack.c.l.b16 %v994
      %v1007 = vunpack.c.l.b16 %v995
      %v1008 = vunpack.c.l.b16 %v996
      %v1009 = vpack.c.b16 %v1006, %v1005
      %v1010 = vpack.c.b16 %v1008, %v1007
      %vm1013 = vcmask 261120
      %v1015 = vsel %vm1013, %v958, 0
      %1017 = vmatpush.bf16.msra.mxu0 0
      %1018 = vmatpush.bf16.msra.mxu0 0
      %1019 = vmatpush.bf16.msra.mxu0 0
      %1020 = vmatpush.bf16.msra.mxu0 0
      %1021 = vmatpush.bf16.msra.mxu0 0
      %1022 = vmatpush.bf16.msra.mxu0 0
      %1023 = vmatpush.bf16.msra.mxu0 %v1010
      %1024 = vmatpush.bf16.msra.mxu0 %v1009
      %1025 = vmatmul.bf16.gmra.mxu0 %v1015
      %v1026 = vpop.f32.mrf.mxu0
      %v1027 = vadd.f32 %v999, %v1026
      %v1028 = vpop.f32.mrf.mxu0
      %1029 = vdwg.mxu0
      %v1030 = vld [vmem:[%s870] sm:$0xf]
      %v1031 = vld [vmem:[%s870 + $0x4] sm:$0xf]
      %v1032 = vld [vmem:[%s870 + $0x8] sm:$0xf]
      %v1033 = vld [vmem:[%s870 + $0xc] sm:$0xf]
      %v1034 = vld [vmem:[%s873] sm:$0x1]
      %v1036 = vperm.slane %v1034, 0
      %v1042 = vunpack.c.l.b16 %v1030
      %v1043 = vunpack.c.l.b16 %v1031
      %v1044 = vunpack.c.l.b16 %v1032
      %v1045 = vunpack.c.l.b16 %v1033
      %v1046 = vpack.c.b16 %v1043, %v1042
      %v1047 = vpack.c.b16 %v1045, %v1044
      %v1051 = vsel %vm1013, %v992, 0
      %1053 = vmatpush.bf16.msra.mxu0 0
      %1054 = vmatpush.bf16.msra.mxu0 0
      %1055 = vmatpush.bf16.msra.mxu0 0
      %1056 = vmatpush.bf16.msra.mxu0 0
      %1057 = vmatpush.bf16.msra.mxu0 0
      %1058 = vmatpush.bf16.msra.mxu0 0
      %1059 = vmatpush.bf16.msra.mxu0 %v1047
      %1060 = vmatpush.bf16.msra.mxu0 %v1046
      %1061 = vmatmul.bf16.gmra.mxu0 %v1051
      %v1062 = vpop.f32.mrf.mxu0
      %v1063 = vadd.f32 %v1036, %v1062
      %v1064 = vpop.f32.mrf.mxu0
      %1065 = vdwg.mxu0
      %1067 = vrot.lane.b32.xlu0 %v1027, 120
      %v1068 = vpop.permute.xlu0 %1067
      %1070 = vrot.lane.b32.xlu0 %v1027, 112
      %v1071 = vpop.permute.xlu0 %1070
      %1073 = vrot.lane.b32.xlu0 %v1027, 104
      %v1074 = vpop.permute.xlu0 %1073
      %v1076 = vpack.c.bf16 %v1027, %v1027
      %v1077 = vpack.c.bf16 %v1068, %v1068
      %v1078 = vpack.c.bf16 %v1071, %v1071
      %v1079 = vpack.c.bf16 %v1074, %v1074
      %1081 = vrot.lane.b32.xlu0 %v1063, 120
      %v1082 = vpop.permute.xlu0 %1081
      %1084 = vrot.lane.b32.xlu0 %v1063, 112
      %v1085 = vpop.permute.xlu0 %1084
      %1087 = vrot.lane.b32.xlu0 %v1063, 104
      %v1088 = vpop.permute.xlu0 %1087
      %v1090 = vpack.c.bf16 %v1063, %v1063
      %v1091 = vpack.c.bf16 %v1082, %v1082
      %v1092 = vpack.c.bf16 %v1085, %v1085
      %v1093 = vpack.c.bf16 %v1088, %v1088
      %vm1094 = vcmask 64512
      %v1096 = vsel %vm1094, %v1076, 0
      %v1099 = vsel %vm1094, %v1090, 0
      %1101 = vmatpush.bf16.xpose.msra.mxu0 0
      %1102 = vmatpush.bf16.xpose.msra.mxu0 0
      %1103 = vmatpush.bf16.xpose.msra.mxu0 0
      %1104 = vmatpush.bf16.xpose.msra.mxu0 0
      %1105 = vmatpush.bf16.xpose.msra.mxu0 0
      %1106 = vmatpush.bf16.xpose.msra.mxu0 0
      %1107 = vmatpush.bf16.xpose.msra.mxu0 0
      %1108 = vmatpush.bf16.xpose.msra.mxu0 %v1099
      %1109 = vmatmul.bf16.gmra.mxu0 %v1096
      %v1110 = vpop.f32.mrf.mxu0
      %v1111 = vadd.f32 0.0, %v1110
      %v1112 = vpop.f32.mrf.mxu0
      %1113 = vdwg.mxu0
      %v1115 = vsel %vm1094, %v1077, 0
      %v1118 = vsel %vm1094, %v1091, 0
      %1120 = vmatpush.bf16.xpose.msra.mxu0 0
      %1121 = vmatpush.bf16.xpose.msra.mxu0 0
      %1122 = vmatpush.bf16.xpose.msra.mxu0 0
      %1123 = vmatpush.bf16.xpose.msra.mxu0 0
      %1124 = vmatpush.bf16.xpose.msra.mxu0 0
      %1125 = vmatpush.bf16.xpose.msra.mxu0 0
      %1126 = vmatpush.bf16.xpose.msra.mxu0 0
      %1127 = vmatpush.bf16.xpose.msra.mxu0 %v1118
      %1128 = vmatmul.bf16.gmra.mxu0 %v1115
      %v1129 = vpop.f32.mrf.mxu0
      %v1130 = vadd.f32 0.0, %v1129
      %v1131 = vpop.f32.mrf.mxu0
      %1132 = vdwg.mxu0
      %v1134 = vsel %vm1094, %v1078, 0
      %v1137 = vsel %vm1094, %v1092, 0
      %1139 = vmatpush.bf16.xpose.msra.mxu0 0
      %1140 = vmatpush.bf16.xpose.msra.mxu0 0
      %1141 = vmatpush.bf16.xpose.msra.mxu0 0
      %1142 = vmatpush.bf16.xpose.msra.mxu0 0
      %1143 = vmatpush.bf16.xpose.msra.mxu0 0
      %1144 = vmatpush.bf16.xpose.msra.mxu0 0
      %1145 = vmatpush.bf16.xpose.msra.mxu0 0
      %1146 = vmatpush.bf16.xpose.msra.mxu0 %v1137
      %1147 = vmatmul.bf16.gmra.mxu0 %v1134
      %v1148 = vpop.f32.mrf.mxu0
      %v1149 = vadd.f32 0.0, %v1148
      %v1150 = vpop.f32.mrf.mxu0
      %1151 = vdwg.mxu0
      %v1153 = vsel %vm1094, %v1079, 0
      %v1156 = vsel %vm1094, %v1093, 0
      %1158 = vmatpush.bf16.xpose.msra.mxu0 0
      %1159 = vmatpush.bf16.xpose.msra.mxu0 0
      %1160 = vmatpush.bf16.xpose.msra.mxu0 0
      %1161 = vmatpush.bf16.xpose.msra.mxu0 0
      %1162 = vmatpush.bf16.xpose.msra.mxu0 0
      %1163 = vmatpush.bf16.xpose.msra.mxu0 0
      %1164 = vmatpush.bf16.xpose.msra.mxu0 0
      %1165 = vmatpush.bf16.xpose.msra.mxu0 %v1156
      %1166 = vmatmul.bf16.gmra.mxu0 %v1153
      %v1167 = vpop.f32.mrf.mxu0
      %v1168 = vadd.f32 0.0, %v1167
      %v1169 = vpop.f32.mrf.mxu0
      %1170 = vdwg.mxu0
      %v1171 = vmul.f32 %v1111, 0.35355338
      %v1172 = vmul.f32 %v1130, 0.35355338
      %v1173 = vmul.f32 %v1149, 0.35355338
      %v1174 = vmul.f32 %v1168, 0.35355338
      %vm1175 = vcmask 12288
      %v1176 = vsel %vm1175, %v1171, -inf
      %1177 = vmax.xlane.f32.xlu0 %v1176
      %v1178 = vpop.xlane.xlu0 %1177
      %v1179 = vsel %vm1175, %v1172, -inf
      %1180 = vmax.xlane.f32.xlu0 %v1179
      %v1181 = vpop.xlane.xlu0 %1180
      %v1182 = vsel %vm1175, %v1173, -inf
      %1183 = vmax.xlane.f32.xlu0 %v1182
      %v1184 = vpop.xlane.xlu0 %1183
      %v1185 = vsel %vm1175, %v1174, -inf
      %1186 = vmax.xlane.f32.xlu0 %v1185
      %v1187 = vpop.xlane.xlu0 %1186
      %v1188 = vsub.f32 %v1171, %v1178
      %v1189 = vsub.f32 %v1172, %v1181
      %v1190 = vsub.f32 %v1173, %v1184
      %v1191 = vsub.f32 %v1174, %v1187
      %v1192 = vmul.f32 %v1188, 1.442695
      %v1193 = vpow.pop %v1192
      %v1194 = vmul.f32 %v1189, 1.442695
      %v1195 = vpow.pop %v1194
      %v1196 = vmul.f32 %v1190, 1.442695
      %v1197 = vpow.pop %v1196
      %v1198 = vmul.f32 %v1191, 1.442695
      %v1199 = vpow.pop %v1198
      %v1200 = vsel %vm1175, %v1193, 0.0
      %1201 = vadd.xlane.f32.xlu0 %v1200
      %v1202 = vpop.xlane.xlu0 %1201
      %v1203 = vsel %vm1175, %v1195, 0.0
      %1204 = vadd.xlane.f32.xlu0 %v1203
      %v1205 = vpop.xlane.xlu0 %1204
      %v1206 = vsel %vm1175, %v1197, 0.0
      %1207 = vadd.xlane.f32.xlu0 %v1206
      %v1208 = vpop.xlane.xlu0 %1207
      %v1209 = vsel %vm1175, %v1199, 0.0
      %1210 = vadd.xlane.f32.xlu0 %v1209
      %v1211 = vpop.xlane.xlu0 %1210
      %v1212 = vrcp.pop %v1202
      %v1213 = vrcp.pop %v1205
      %v1214 = vrcp.pop %v1208
      %v1215 = vrcp.pop %v1211
      %v1216 = vmul.f32 %v1193, %v1212
      %v1217 = vmul.f32 %v1195, %v1213
      %v1218 = vmul.f32 %v1197, %v1214
      %v1219 = vmul.f32 %v1199, %v1215
      %v1220 = vpack.c.bf16 %v1216, %v1216
      %v1221 = vpack.c.bf16 %v1217, %v1217
      %v1222 = vpack.c.bf16 %v1218, %v1218
      %v1223 = vpack.c.bf16 %v1219, %v1219
      %v1225 = vunpack.c.l.b16 %v1090
      %v1226 = vpack.c.b16 %v1225, %v1225
      %1227 = vrot.lane.b32.xlu0 %v1226, 96
      %v1228 = vpop.permute.xlu0 %1227
      %vm1229 = vcmask 15360
      %v1231 = vsel %vm1229, %v1220, 0
      %vm1233 = vcmask 1040384
      %v1235 = vsel %vm1233, %v1228, 0
      %1237 = vmatpush.bf16.msra.mxu0 0
      %1238 = vmatpush.bf16.msra.mxu0 0
      %1239 = vmatpush.bf16.msra.mxu0 0
      %1240 = vmatpush.bf16.msra.mxu0 0
      %1241 = vmatpush.bf16.msra.mxu0 0
      %1242 = vmatpush.bf16.msra.mxu0 0
      %1243 = vmatpush.bf16.msra.mxu0 0
      %1244 = vmatpush.bf16.msra.mxu0 %v1235
      %1245 = vmatmul.bf16.gmra.mxu0 %v1231
      %v1246 = vpop.f32.mrf.mxu0
      %v1247 = vadd.f32 0.0, %v1246
      %v1248 = vpop.f32.mrf.mxu0
      %1249 = vdwg.mxu0
      %v1251 = vunpack.c.l.b16 %v1091
      %v1252 = vpack.c.b16 %v1251, %v1251
      %1253 = vrot.lane.b32.xlu0 %v1252, 96
      %v1254 = vpop.permute.xlu0 %1253
      %v1256 = vsel %vm1229, %v1221, 0
      %v1259 = vsel %vm1233, %v1254, 0
      %1261 = vmatpush.bf16.msra.mxu0 0
      %1262 = vmatpush.bf16.msra.mxu0 0
      %1263 = vmatpush.bf16.msra.mxu0 0
      %1264 = vmatpush.bf16.msra.mxu0 0
      %1265 = vmatpush.bf16.msra.mxu0 0
      %1266 = vmatpush.bf16.msra.mxu0 0
      %1267 = vmatpush.bf16.msra.mxu0 0
      %1268 = vmatpush.bf16.msra.mxu0 %v1259
      %1269 = vmatmul.bf16.gmra.mxu0 %v1256
      %v1270 = vpop.f32.mrf.mxu0
      %v1271 = vadd.f32 0.0, %v1270
      %v1272 = vpop.f32.mrf.mxu0
      %1273 = vdwg.mxu0
      %v1275 = vunpack.c.l.b16 %v1092
      %v1276 = vpack.c.b16 %v1275, %v1275
      %1277 = vrot.lane.b32.xlu0 %v1276, 96
      %v1278 = vpop.permute.xlu0 %1277
      %v1280 = vsel %vm1229, %v1222, 0
      %v1283 = vsel %vm1233, %v1278, 0
      %1285 = vmatpush.bf16.msra.mxu0 0
      %1286 = vmatpush.bf16.msra.mxu0 0
      %1287 = vmatpush.bf16.msra.mxu0 0
      %1288 = vmatpush.bf16.msra.mxu0 0
      %1289 = vmatpush.bf16.msra.mxu0 0
      %1290 = vmatpush.bf16.msra.mxu0 0
      %1291 = vmatpush.bf16.msra.mxu0 0
      %1292 = vmatpush.bf16.msra.mxu0 %v1283
      %1293 = vmatmul.bf16.gmra.mxu0 %v1280
      %v1294 = vpop.f32.mrf.mxu0
      %v1295 = vadd.f32 0.0, %v1294
      %v1296 = vpop.f32.mrf.mxu0
      %1297 = vdwg.mxu0
      %v1299 = vunpack.c.l.b16 %v1093
      %v1300 = vpack.c.b16 %v1299, %v1299
      %1301 = vrot.lane.b32.xlu0 %v1300, 96
      %v1302 = vpop.permute.xlu0 %1301
      %v1304 = vsel %vm1229, %v1223, 0
      %v1307 = vsel %vm1233, %v1302, 0
      %1309 = vmatpush.bf16.msra.mxu0 0
      %1310 = vmatpush.bf16.msra.mxu0 0
      %1311 = vmatpush.bf16.msra.mxu0 0
      %1312 = vmatpush.bf16.msra.mxu0 0
      %1313 = vmatpush.bf16.msra.mxu0 0
      %1314 = vmatpush.bf16.msra.mxu0 0
      %1315 = vmatpush.bf16.msra.mxu0 0
      %1316 = vmatpush.bf16.msra.mxu0 %v1307
      %1317 = vmatmul.bf16.gmra.mxu0 %v1304
      %v1318 = vpop.f32.mrf.mxu0
      %v1319 = vadd.f32 0.0, %v1318
      %v1320 = vpop.f32.mrf.mxu0
      %1321 = vdwg.mxu0
      %vm1322 = vcmask 61440
      %1323 = vst.msk [vmem:[#allocation2] sm:$0x1f] %vm1322, %v1247
      %1325 = vrot.lane.b32.xlu0 %v1271, 8
      %v1326 = vpop.permute.xlu0 %1325
      %vm1328 = vcmask 127040
      %1329 = vst.msk [vmem:[#allocation2] sm:$0x1f] %vm1328, %v1326
      %1331 = vrot.lane.b32.xlu0 %v1295, 16
      %v1332 = vpop.permute.xlu0 %1331
      %vm1334 = vcmask 192640
      %1335 = vst.msk [vmem:[#allocation2] sm:$0x1f] %vm1334, %v1332
      %1337 = vrot.lane.b32.xlu0 %v1319, 24
      %v1338 = vpop.permute.xlu0 %1337
      %vm1340 = vcmask 258240
      %1341 = vst.msk [vmem:[#allocation2] sm:$0x1f] %vm1340, %v1338
      %v1342 = vld [vmem:[#allocation2] sm:$0x1f]
      %v1343 = vpack.c.bf16 %v1342, %v1342
      %v1344 = vld [vmem:[%s878] sm:$0xf]
      %v1345 = vld [vmem:[%s878 + $0x4] sm:$0xf]
      %v1346 = vld [vmem:[%s878 + $0x8] sm:$0xf]
      %v1347 = vld [vmem:[%s878 + $0xc] sm:$0xf]
      %v1348 = vld [vmem:[%s881] sm:$0x1]
      %v1350 = vperm.slane %v1348, 0
      %v1356 = vunpack.c.l.b16 %v1344
      %v1357 = vunpack.c.l.b16 %v1345
      %v1358 = vunpack.c.l.b16 %v1346
      %v1359 = vunpack.c.l.b16 %v1347
      %v1360 = vpack.c.b16 %v1357, %v1356
      %v1361 = vpack.c.b16 %v1359, %v1358
      %v1365 = vsel %vm1013, %v1343, 0
      %1367 = vmatpush.bf16.msra.mxu0 0
      %1368 = vmatpush.bf16.msra.mxu0 0
      %1369 = vmatpush.bf16.msra.mxu0 0
      %1370 = vmatpush.bf16.msra.mxu0 0
      %1371 = vmatpush.bf16.msra.mxu0 0
      %1372 = vmatpush.bf16.msra.mxu0 0
      %1373 = vmatpush.bf16.msra.mxu0 %v1361
      %1374 = vmatpush.bf16.msra.mxu0 %v1360
      %1375 = vmatmul.bf16.gmra.mxu0 %v1365
      %v1376 = vpop.f32.mrf.mxu0
      %v1377 = vadd.f32 %v1350, %v1376
      %v1378 = vpop.f32.mrf.mxu0
      %1379 = vdwg.mxu0
      %v1380 = vadd.f32 %v916, %v1377
      %v1381 = vld [vmem:[%s884] sm:$0x1]
      %v1382 = vld [vmem:[%s887] sm:$0x1]
      %v1383 = vsel %vm920, %v1380, 0.0
      %1384 = vadd.xlane.f32.xlu0 %v1383
      %v1385 = vpop.xlane.xlu0 %1384
      %v1386 = vmul.f32 %v1385, %v930
      %v1387 = vsub.f32 %v1380, %v1386
      %v1388 = vmul.f32 %v1387, %v1387
      %v1389 = vsel %vm920, %v1388, 0.0
      %1390 = vadd.xlane.f32.xlu0 %v1389
      %v1391 = vpop.xlane.xlu0 %1390
      %v1392 = vmul.f32 %v1391, %v930
      %v1393 = vadd.f32 %v1392, 1e-06
      %v1394 = vrsqrt.pop %v1393
      %v1395 = vmul.f32 %v1394, %v1393
      %v1396 = vmul.f32 %v1395, %v1394
      %v1397 = vmul.f32 0.5, %v1396
      %v1398 = vsub.f32 1.5, %v1397
      %v1399 = vmul.f32 %v1394, %v1398
      %vm1400 = vweird.f32 %v1393
      %vm1401 = vweird.f32 %v1394
      %vm1402 = vmor %vm1400, %vm1401
      %v1403 = vsel %vm1402, %v1394, %v1399
      %v1404 = vmul.f32 %v1387, %v1403
      %v1406 = vperm.slane %v1381, 0
      %v1408 = vmul.f32 %v1404, %v1406
      %v1410 = vperm.slane %v1382, 0
      %v1412 = vadd.f32 %v1408, %v1410
      %v1413 = vpack.c.bf16 %v1412, %v1412
      %v1414 = vld [vmem:[%s892] sm:$0xf]
      %v1415 = vld [vmem:[%s892 + $0x4] sm:$0xf]
      %v1416 = vld [vmem:[%s892 + $0x8] sm:$0xf]
      %v1417 = vld [vmem:[%s892 + $0xc] sm:$0xf]
      %v1418 = vld [vmem:[%s895] sm:$0x1]
      %v1420 = vperm.slane %v1418, 0
      %v1426 = vunpack.c.l.b16 %v1414
      %v1427 = vunpack.c.l.b16 %v1415
      %v1428 = vunpack.c.l.b16 %v1416
      %v1429 = vunpack.c.l.b16 %v1417
      %v1430 = vpack.c.b16 %v1427, %v1426
      %v1431 = vpack.c.b16 %v1429, %v1428
      %v1435 = vsel %vm1013, %v1413, 0
      %1437 = vmatpush.bf16.msra.mxu0 0
      %1438 = vmatpush.bf16.msra.mxu0 0
      %1439 = vmatpush.bf16.msra.mxu0 0
      %1440 = vmatpush.bf16.msra.mxu0 0
      %1441 = vmatpush.bf16.msra.mxu0 0
      %1442 = vmatpush.bf16.msra.mxu0 0
      %1443 = vmatpush.bf16.msra.mxu0 %v1431
      %1444 = vmatpush.bf16.msra.mxu0 %v1430
      %1445 = vmatmul.bf16.gmra.mxu0 %v1435
      %v1446 = vpop.f32.mrf.mxu0
      %v1447 = vadd.f32 %v1420, %v1446
      %v1448 = vpop.f32.mrf.mxu0
      %1449 = vdwg.mxu0
      %v1450 = vmul.f32 %v1447, %v1447
      %v1451 = vmul.f32 %v1447, %v1450
      %v1452 = vmul.f32 %v1451, 0.044715
      %v1453 = vadd.f32 %v1447, %v1452
      %v1454 = vmul.f32 %v1453, 0.7978846
      %v1455 = vtanh.pop %v1454
      %v1456 = vadd.f32 %v1455, 1.0
      %v1457 = vmul.f32 %v1456, 0.5
      %v1458 = vmul.f32 %v1447, %v1457
      %v1459 = vpack.c.bf16 %v1458, %v1458
      %v1460 = vld [vmem:[%s900] sm:$0xf]
      %v1461 = vld [vmem:[%s900 + $0x4] sm:$0xf]
      %v1462 = vld [vmem:[%s900 + $0x8] sm:$0xf]
      %v1463 = vld [vmem:[%s900 + $0xc] sm:$0xf]
      %v1464 = vld [vmem:[%s900 + $0x10] sm:$0xf]
      %v1465 = vld [vmem:[%s900 + $0x14] sm:$0xf]
      %v1466 = vld [vmem:[%s900 + $0x18] sm:$0xf]
      %v1467 = vld [vmem:[%s900 + $0x1c] sm:$0xf]
      %v1468 = vld [vmem:[%s903] sm:$0x1]
      %v1470 = vperm.slane %v1468, 0
      %v1480 = vunpack.c.l.b16 %v1460
      %v1481 = vunpack.c.l.b16 %v1461
      %v1482 = vunpack.c.l.b16 %v1462
      %v1483 = vunpack.c.l.b16 %v1463
      %v1484 = vunpack.c.l.b16 %v1464
      %v1485 = vunpack.c.l.b16 %v1465
      %v1486 = vunpack.c.l.b16 %v1466
      %v1487 = vunpack.c.l.b16 %v1467
      %v1488 = vpack.c.b16 %v1481, %v1480
      %v1489 = vpack.c.b16 %v1483, %v1482
      %v1490 = vpack.c.b16 %v1485, %v1484
      %v1491 = vpack.c.b16 %v1487, %v1486
      %vm1496 = vcmask 523264
      %v1498 = vsel %vm1496, %v1459, 0
      %1500 = vmatpush.bf16.msra.mxu0 0
      %1501 = vmatpush.bf16.msra.mxu0 0
      %1502 = vmatpush.bf16.msra.mxu0 0
      %1503 = vmatpush.bf16.msra.mxu0 0
      %1504 = vmatpush.bf16.msra.mxu0 %v1491
      %1505 = vmatpush.bf16.msra.mxu0 %v1490
      %1506 = vmatpush.bf16.msra.mxu0 %v1489
      %1507 = vmatpush.bf16.msra.mxu0 %v1488
      %1508 = vmatmul.bf16.gmra.mxu0 %v1498
      %v1509 = vpop.f32.mrf.mxu0
      %v1510 = vadd.f32 %v1470, %v1509
      %v1511 = vpop.f32.mrf.mxu0
      %1512 = vdwg.mxu0
      %v1513 = vadd.f32 %v1380, %v1510
      %1514 = vst.msk [vmem:[%s907] sm:$0x1f] %vm920, %v1513
      %p1515 = scmp.eq.s32.totalorder %s36, 1
      // Predicated region
      $region105: #{_lambda_.2} parent=99 // pred_check
        %p1516 = pneg %p1515
      $region106: #{_lambda_.2} parent=99 // pred_check_branch
        %1518 = sbr.rel (%p1516) target = $region108
      $region107: #{_lambda_.2} parent=99 // pred_region
        %v1519 = vld [vmem:[%s18] sm:$0x1]
        %v1520 = vld [vmem:[%s19] sm:$0x1]
        %v1521 = vsel %vm920, %v1513, 0.0
        %1522 = vadd.xlane.f32.xlu0 %v1521
        %v1523 = vpop.xlane.xlu0 %1522
        %v1524 = vmul.f32 %v1523, %v930
        %v1525 = vsub.f32 %v1513, %v1524
        %v1526 = vmul.f32 %v1525, %v1525
        %v1527 = vsel %vm920, %v1526, 0.0
        %1528 = vadd.xlane.f32.xlu0 %v1527
        %v1529 = vpop.xlane.xlu0 %1528
        %v1530 = vmul.f32 %v1529, %v930
        %v1531 = vadd.f32 %v1530, 1e-06
        %v1532 = vrsqrt.pop %v1531
        %v1533 = vmul.f32 %v1532, %v1531
        %v1534 = vmul.f32 %v1533, %v1532
        %v1535 = vmul.f32 0.5, %v1534
        %v1536 = vsub.f32 1.5, %v1535
        %v1537 = vmul.f32 %v1532, %v1536
        %vm1538 = vweird.f32 %v1531
        %vm1539 = vweird.f32 %v1532
        %vm1540 = vmor %vm1538, %vm1539
        %v1541 = vsel %vm1540, %v1532, %v1537
        %v1542 = vmul.f32 %v1525, %v1541
        %v1544 = vperm.slane %v1519, 0
        %v1546 = vmul.f32 %v1542, %v1544
        %v1548 = vperm.slane %v1520, 0
        %v1550 = vadd.f32 %v1546, %v1548
        %1551 = vst.msk [vmem:[%s907] sm:$0x1f] %vm920, %v1550
      $region108: #{_lambda_.2} parent=99 // pred_fallthru
        _
      %p1552 = scmp.lt.s32.totalorder %s35, 1
      %s1553 = scalar_select %p1552, %s35, 1
      %s1554 = smul.addr %s1553, 8
      %s1555 = scalar_lea.vmem %s20, %s1554
      // Predicated region
      $region109: #{_lambda_.2} parent=99 // pred_check
        %p1556 = pneg %p571
      $region110: #{_lambda_.2} parent=99 // pred_check_branch
        %1558 = sbr.rel (%p1556) target = $region112
      $region111: #{_lambda_.2} parent=99 // pred_region
        _
      $region112: #{_lambda_.2} parent=99 // pred_fallthru
        _
    $region100: #{_lambda_.2} parent=5 // pred_fallthru
      _
    %p1559 = scmp.le.s32.totalorder 2, %s26
    // Predicated region
    $region113: #{_lambda_.2} parent=5 // pred_check
      %p1560 = pneg %p1559
    $region114: #{_lambda_.2} parent=5 // pred_check_branch
      %1562 = sbr.rel (%p1560) target = $region116
    $region115: #{_lambda_.2} parent=5 // pred_region
      %s1563 = ssub.s32 %s26, 2
      // Predicated region
      $region117: #{_lambda_.2} parent=115 // pred_check
        %p1564 = pneg %p577
      $region118: #{_lambda_.2} parent=115 // pred_check_branch
        %1566 = sbr.rel (%p1564) target = $region120
      $region119: #{_lambda_.2} parent=115 // pred_region
        %p1567 = scmp.lt.s32.totalorder %s37, 1
        %s1568 = scalar_select %p1567, %s37, 1
        %s1569 = smul.addr %s1568, 8
        %s1570 = scalar_lea.vmem %s20, %s1569
      $region120: #{_lambda_.2} parent=115 // pred_fallthru
        _
    $region116: #{_lambda_.2} parent=5 // pred_fallthru
      _
  $region6: #{_lambda_.2} parent=0 // loop_footer
    %s30 = sadd.s32 1, %s26
  $region7: #{_lambda_.2} parent=0 // loop_footer_branch
    %25 = sbr.rel target = $region3
  $region8: #{_lambda_.2} parent=0 // loop_exit
    _

</llo_original>
